<compile_context>
chip_gen: v7x
topology: tpu7x:2x2x1
jax: 0.10.0
libtpu: 0.0.40
codegen_flags: <defaults>
</compile_context>

<pallas_src>
import functools

import jax
import jax.numpy as jnp
from jax.experimental import pallas as pl
from jax.experimental.pallas import tpu as pltpu


# ---------------------------------------------------------------------------
# helpers
# ---------------------------------------------------------------------------
def _round_up(x, m):
    return ((x + m - 1) // m) * m


_VMEM_BUDGET = 20 * 1024 * 1024  # headroom under the 32 MiB scoped-VMEM limit


def _plan_tiles(n, d_pad):
    """Pick N padding and the largest (TM, TK) tiles that fit the VMEM budget."""
    n_pad = _round_up(n, 128)
    best = (128, 128)
    best_area = 0
    for tm in (1024, 512, 256, 128):
        if n_pad % tm:
            continue
        for tk in (2048, 1024, 512, 256, 128):
            if n_pad % tk:
                continue
            vmem = (
                2 * tm * tk * 2          # A_hat tile, double-buffered (bf16)
                + 2 * tk * d_pad * 2     # cur K-slab, double-buffered (bf16)
                + 2 * tm * d_pad * 4     # acc_in tile (f32)
                + 2 * tm * d_pad * 2     # next out (bf16)
                + 2 * tm * d_pad * 4     # acc out (f32)
                + tm * d_pad * 4         # f32 matmul accumulator scratch
            )
            if vmem <= _VMEM_BUDGET and tm * tk > best_area:
                best, best_area = (tm, tk), tm * tk
    return n_pad, best[0], best[1]


def _pad2(x, rows, cols):
    return jnp.pad(x, ((0, rows - x.shape[0]), (0, cols - x.shape[1])))


# ---------------------------------------------------------------------------
# kernels
# ---------------------------------------------------------------------------
def _emb0_kernel(emb_ref, feats_ref, w_ref, b_ref, f32_ref, bf16_ref):
    """emb0 = embedding.weight + feats @ W + b for one row tile."""
    emb0 = (
        emb_ref[...]
        + jnp.dot(feats_ref[...], w_ref[...], preferred_element_type=jnp.float32)
        + b_ref[...]
    )
    f32_ref[...] = emb0                        # mean-accumulator seed (f32)
    bf16_ref[...] = emb0.astype(jnp.bfloat16)  # propagation input (bf16)


def _lgconv_kernel(inv_scale, a_ref, cur_ref, acc_ref, next_ref, acc_out_ref, mm_ref):
    """One LGConv layer for one (row tile, K tile) grid step.

    next    = A_hat @ cur                (f32 accumulate over K tiles)
    acc_out = (acc_in + next) * inv_scale
    """
    k = pl.program_id(1)

    @pl.when(k == 0)
    def _():
        mm_ref[...] = jnp.zeros_like(mm_ref)

    mm_ref[...] += jnp.dot(
        a_ref[...], cur_ref[...], preferred_element_type=jnp.float32
    )

    @pl.when(k == pl.num_programs(1) - 1)
    def _():
        nxt = mm_ref[...]
        next_ref[...] = nxt.astype(next_ref.dtype)
        acc_out_ref[...] = (acc_ref[...] + nxt) * inv_scale


# ---------------------------------------------------------------------------
# forward pass
# ---------------------------------------------------------------------------
def recsys_gnn_forward(emb_weight, feats_tensor, w_feat, b_feat, a_hat, *, num_layers):
    N, D = emb_weight.shape
    F = feats_tensor.shape[1]

    d_pad = _round_up(max(D, 128), 128)
    n_pad, tm, tk = _plan_tiles(N, d_pad)

    emb_p = _pad2(emb_weight.astype(jnp.float32), n_pad, d_pad)
    feats_p = _pad2(feats_tensor.astype(jnp.float32), n_pad, F)
    w_p = _pad2(w_feat.astype(jnp.float32), F, d_pad)
    b_p = _pad2(b_feat.reshape(1, D).astype(jnp.float32), 1, d_pad)
    a_p = _pad2(a_hat.astype(jnp.float32), n_pad, n_pad).astype(jnp.bfloat16)

    nr = n_pad // tm
    nk = n_pad // tk

    # ---- layer 0: embedding + feature projection (row-tiled, megacore parallel)
    emb0_f32, emb0_bf16 = pl.pallas_call(
        _emb0_kernel,
        out_shape=(
            jax.ShapeDtypeStruct((n_pad, d_pad), jnp.float32),
            jax.ShapeDtypeStruct((n_pad, d_pad), jnp.bfloat16),
        ),
        grid_spec=pltpu.PrefetchScalarGridSpec(
            num_scalar_prefetch=0,
            grid=(nr,),
            in_specs=[
                pl.BlockSpec((tm, d_pad), lambda i: (i, 0)),
                pl.BlockSpec((tm, F), lambda i: (i, 0)),
                pl.BlockSpec((F, d_pad), lambda i: (0, 0)),
                pl.BlockSpec((1, d_pad), lambda i: (0, 0)),
            ],
            out_specs=[
                pl.BlockSpec((tm, d_pad), lambda i: (i, 0)),
                pl.BlockSpec((tm, d_pad), lambda i: (i, 0)),
            ],
        ),
        compiler_params=pltpu.CompilerParams(dimension_semantics=("parallel",)),
    )(emb_p, feats_p, w_p, b_p)

    if num_layers == 0:
        return emb0_f32[:N, :D]

    cost = pl.CostEstimate(
        flops=2 * n_pad * n_pad * d_pad,
        transcendentals=0,
        bytes_accessed=(
            n_pad * n_pad * 2            # A_hat (bf16), read once per layer
            + nr * n_pad * d_pad * 2     # cur re-streamed per row tile (bf16)
            + 3 * n_pad * d_pad * 4      # acc in/out + next
        ),
    )

    lgconv_params = pltpu.CompilerParams(
        dimension_semantics=("parallel", "arbitrary"),
        vmem_limit_bytes=32 * 1024 * 1024,
    )

    acc = emb0_f32
    cur = emb0_bf16
    for layer in range(num_layers):
        is_last = layer == num_layers - 1
        inv_scale = (1.0 / float(num_layers + 1)) if is_last else 1.0
        cur, acc = pl.pallas_call(
            functools.partial(_lgconv_kernel, inv_scale),
            out_shape=(
                jax.ShapeDtypeStruct((n_pad, d_pad), jnp.bfloat16),  # next
                jax.ShapeDtypeStruct((n_pad, d_pad), jnp.float32),   # acc_out
            ),
            grid_spec=pltpu.PrefetchScalarGridSpec(
                num_scalar_prefetch=0,
                grid=(nr, nk),
                in_specs=[
                    pl.BlockSpec((tm, tk), lambda i, k: (i, k)),      # A_hat tile
                    pl.BlockSpec((tk, d_pad), lambda i, k: (k, 0)),   # cur K-slab
                    pl.BlockSpec((tm, d_pad), lambda i, k: (i, 0)),   # acc_in tile
                ],
                out_specs=[
                    pl.BlockSpec((tm, d_pad), lambda i, k: (i, 0)),
                    pl.BlockSpec((tm, d_pad), lambda i, k: (i, 0)),
                ],
                scratch_shapes=[pltpu.VMEM((tm, d_pad), jnp.float32)],
            ),
            compiler_params=lgconv_params,
            cost_estimate=cost,
            # acc_in (input 2) and acc_out (output 1) touch disjoint row tiles
            # per grid step, so aliasing is race-free and saves an HBM buffer.
            input_output_aliases={2: 1},
        )(a_p, cur, acc)

    return acc[:N, :D]


# ---------------------------------------------------------------------------
# adjacency build (plain JAX glue) + reference
# ---------------------------------------------------------------------------
def build_normalized_adjacency(edge_index, num_nodes):
    """Dense D^-1/2 A D^-1/2 as used by torch_geometric LGConv (gcn_norm,
    add_self_loops=False, flow='source_to_target')."""
    src = edge_index[0]
    dst = edge_index[1]
    a = jnp.zeros((num_nodes, num_nodes), jnp.float32).at[dst, src].add(1.0)
    deg = jnp.zeros((num_nodes,), jnp.float32).at[dst].add(1.0)
    deg_inv_sqrt = jnp.where(deg > 0, jax.lax.rsqrt(jnp.maximum(deg, 1e-12)), 0.0)
    return deg_inv_sqrt[:, None] * a * deg_inv_sqrt[None, :]


def reference_forward(emb_weight, feats_tensor, w_feat, b_feat, a_hat, num_layers):
    emb = emb_weight + feats_tensor @ w_feat + b_feat[None, :]
    embs = [emb]
    cur = emb
    for _ in range(num_layers):
        cur = a_hat @ cur
        embs.append(cur)
    return jnp.mean(jnp.stack(embs, axis=0), axis=0)


# ---------------------------------------------------------------------------
# demo / correctness check
# ---------------------------------------------------------------------------
if __name__ == "__main__":
    num_users = 8
    num_items = 8
    latent_dim = 32
    feat_dim = 8
    num_layers = 2
    N = num_users + num_items

    key = jax.random.PRNGKey(0)
    k_emb, k_w, k_b, k_feat = jax.random.split(key, 4)

    # nn.init.normal_(embedding.weight, std=0.1)
    emb_weight = 0.1 * jax.random.normal(k_emb, (N, latent_dim), jnp.float32)
    # nn.Linear(feat_dim, latent_dim): stored pre-transposed as (F, D)
    bound = 1.0 / (feat_dim ** 0.5)
    w_feat = jax.random.uniform(k_w, (feat_dim, latent_dim), jnp.float32, -bound, bound)
    b_feat = jax.random.uniform(k_b, (latent_dim,), jnp.float32, -bound, bound)
    feats_tensor = jax.random.normal(k_feat, (N, feat_dim), jnp.float32)

    # Deterministic bipartite user<->item edges (both directions)
    users = jnp.arange(num_users, dtype=jnp.int32)
    items_a = num_users + (users % num_items)
    items_b = num_users + ((users + 3) % num_items)
    src = jnp.concatenate([users, users, items_a, items_b])
    dst = jnp.concatenate([items_a, items_b, users, users])
    edge_index = jnp.stack([src, dst], axis=0)  # (2, E)

    a_hat = build_normalized_adjacency(edge_index, N)

    forward = jax.jit(functools.partial(recsys_gnn_forward, num_layers=num_layers))
    out = jax.block_until_ready(forward(emb_weight, feats_tensor, w_feat, b_feat, a_hat))

    ref = reference_forward(emb_weight, feats_tensor, w_feat, b_feat, a_hat, num_layers)
    assert out.shape == (N, latent_dim)
    # bf16 A_hat / propagated embeddings -> loosened tolerance vs f32 reference
    assert jnp.allclose(out, ref, atol=1e-2, rtol=1e-2), "mismatch vs reference"

    print("KERNEL_OK")
</pallas_src>

<mosaic_0001>
module attributes {stable_mosaic.version = 11 : i64} {
  func.func @_emb0_kernel(%arg0: i32, %arg1: memref<128x128xf32, #tpu.memory_space<vmem>>, %arg2: memref<128x8xf32, #tpu.memory_space<vmem>>, %arg3: memref<8x128xf32, #tpu.memory_space<vmem>>, %arg4: memref<1x128xf32, #tpu.memory_space<vmem>>, %arg5: memref<128x128xf32, #tpu.memory_space<vmem>>, %arg6: memref<128x128xbf16, #tpu.memory_space<vmem>>) attributes {dimension_semantics = [#tpu.dimension_semantics<parallel>], iteration_bounds = array<i64: 1>, scalar_prefetch = 0 : i64, scratch_operands = 0 : i64, tpu.core_type = #tpu.core_type<tc>, window_params = [{transform_indices = @transform_0, window_bounds = array<i64: 128, 128>}, {transform_indices = @transform_1, window_bounds = array<i64: 128, 8>}, {pipeline_mode = #tpu.pipeline_mode<synchronous>, transform_indices = @transform_2, window_bounds = array<i64: 8, 128>}, {pipeline_mode = #tpu.pipeline_mode<synchronous>, transform_indices = @transform_3, window_bounds = array<i64: 1, 128>}, {transform_indices = @transform_4, window_bounds = array<i64: 128, 128>}, {transform_indices = @transform_5, window_bounds = array<i64: 128, 128>}]} {
    %c0 = arith.constant 0 : index
    %c0_0 = arith.constant 0 : index
    %0 = vector.load %arg1[%c0, %c0_0] : memref<128x128xf32, #tpu.memory_space<vmem>>, vector<128x128xf32>
    %c0_1 = arith.constant 0 : index
    %c0_2 = arith.constant 0 : index
    %1 = vector.load %arg2[%c0_1, %c0_2] : memref<128x8xf32, #tpu.memory_space<vmem>>, vector<128x8xf32>
    %c0_3 = arith.constant 0 : index
    %c0_4 = arith.constant 0 : index
    %2 = vector.load %arg3[%c0_3, %c0_4] : memref<8x128xf32, #tpu.memory_space<vmem>>, vector<8x128xf32>
    %cst = arith.constant dense<0.000000e+00> : vector<128x128xf32>
    %3 = tpu.matmul %1, %2, %cst {dimension_numbers = #tpu.dot_dimension_numbers<[1], [0], [0], [1], [0, 0, 1, 1], [], []>} : vector<128x8xf32>, vector<8x128xf32>, vector<128x128xf32> -> vector<128x128xf32>
    %4 = arith.addf %0, %3 : vector<128x128xf32>
    %c0_5 = arith.constant 0 : index
    %c0_6 = arith.constant 0 : index
    %5 = vector.load %arg4[%c0_5, %c0_6] : memref<1x128xf32, #tpu.memory_space<vmem>>, vector<1x128xf32>
    %6 = vector.broadcast %5 : vector<1x128xf32> to vector<128x128xf32>
    %7 = arith.addf %4, %6 : vector<128x128xf32>
    %c0_7 = arith.constant 0 : index
    %c0_8 = arith.constant 0 : index
    %8 = vector.load %arg5[%c0_7, %c0_8] : memref<128x128xf32, #tpu.memory_space<vmem>>, vector<128x128xf32>
    tpu.vector_store %arg5[%c0_7, %c0_8], %7 {strides = array<i32>} : memref<128x128xf32, #tpu.memory_space<vmem>>, vector<128x128xf32>,
    %9 = arith.truncf %7 : vector<128x128xf32> to vector<128x128xbf16>
    %c0_9 = arith.constant 0 : index
    %c0_10 = arith.constant 0 : index
    %10 = vector.load %arg6[%c0_9, %c0_10] : memref<128x128xbf16, #tpu.memory_space<vmem>>, vector<128x128xbf16>
    tpu.vector_store %arg6[%c0_9, %c0_10], %9 {strides = array<i32>} : memref<128x128xbf16, #tpu.memory_space<vmem>>, vector<128x128xbf16>,
    return
  }
  func.func @transform_0(%arg0: i32) -> (i32, i32) {
    %c0_i32 = arith.constant 0 : i32
    %c0_i32_0 = arith.constant 0 : i32
    return %arg0, %c0_i32 : i32, i32
  }
  func.func @transform_1(%arg0: i32) -> (i32, i32) {
    %c0_i32 = arith.constant 0 : i32
    %c0_i32_0 = arith.constant 0 : i32
    return %arg0, %c0_i32 : i32, i32
  }
  func.func @transform_2(%arg0: i32) -> (i32, i32) {
    %c0_i32 = arith.constant 0 : i32
    %c0_i32_0 = arith.constant 0 : i32
    %c0_i32_1 = arith.constant 0 : i32
    return %c0_i32, %c0_i32_0 : i32, i32
  }
  func.func @transform_3(%arg0: i32) -> (i32, i32) {
    %c0_i32 = arith.constant 0 : i32
    %c0_i32_0 = arith.constant 0 : i32
    %c0_i32_1 = arith.constant 0 : i32
    return %c0_i32, %c0_i32_0 : i32, i32
  }
  func.func @transform_4(%arg0: i32) -> (i32, i32) {
    %c0_i32 = arith.constant 0 : i32
    %c0_i32_0 = arith.constant 0 : i32
    return %arg0, %c0_i32 : i32, i32
  }
  func.func @transform_5(%arg0: i32) -> (i32, i32) {
    %c0_i32 = arith.constant 0 : i32
    %c0_i32_0 = arith.constant 0 : i32
    return %arg0, %c0_i32 : i32, i32
  }
}

module attributes {stable_mosaic.version = 11 : i64} {
  func.func @_lgconv_kernel(%arg0: i32, %arg1: i32, %arg2: memref<128x128xbf16, #tpu.memory_space<vmem>>, %arg3: memref<128x128xbf16, #tpu.memory_space<vmem>>, %arg4: memref<128x128xf32, #tpu.memory_space<vmem>>, %arg5: memref<128x128xbf16, #tpu.memory_space<vmem>>, %arg6: memref<128x128xf32, #tpu.memory_space<vmem>>, %arg7: memref<128x128xf32, #tpu.memory_space<vmem>>) attributes {dimension_semantics = [#tpu.dimension_semantics<parallel>, #tpu.dimension_semantics<arbitrary>], iteration_bounds = array<i64: 1, 1>, scalar_prefetch = 0 : i64, scratch_operands = 1 : i64, tpu.core_type = #tpu.core_type<tc>, window_params = [{transform_indices = @transform_0, window_bounds = array<i64: 128, 128>}, {transform_indices = @transform_1, window_bounds = array<i64: 128, 128>}, {transform_indices = @transform_2, window_bounds = array<i64: 128, 128>}, {transform_indices = @transform_3, window_bounds = array<i64: 128, 128>}, {transform_indices = @transform_4, window_bounds = array<i64: 128, 128>}]} {
    %c0_i32 = arith.constant 0 : i32
    %0 = arith.cmpi eq, %arg1, %c0_i32 : i32
    %1 = arith.extui %0 : i1 to i32
    %c0_i32_0 = arith.constant 0 : i32
    %2 = arith.cmpi ne, %1, %c0_i32_0 : i32
    scf.if %2 {
      %cst_10 = arith.constant 0.000000e+00 : f32
      %12 = vector.broadcast %cst_10 : f32 to vector<128x128xf32>
      %c0_11 = arith.constant 0 : index
      %c0_12 = arith.constant 0 : index
      %13 = vector.load %arg7[%c0_11, %c0_12] : memref<128x128xf32, #tpu.memory_space<vmem>>, vector<128x128xf32>
      tpu.vector_store %arg7[%c0_11, %c0_12], %12 {strides = array<i32>} : memref<128x128xf32, #tpu.memory_space<vmem>>, vector<128x128xf32>,
    } else {
    }
    %c0 = arith.constant 0 : index
    %c0_1 = arith.constant 0 : index
    %3 = vector.load %arg7[%c0, %c0_1] : memref<128x128xf32, #tpu.memory_space<vmem>>, vector<128x128xf32>
    %c0_2 = arith.constant 0 : index
    %c0_3 = arith.constant 0 : index
    %4 = vector.load %arg2[%c0_2, %c0_3] : memref<128x128xbf16, #tpu.memory_space<vmem>>, vector<128x128xbf16>
    %c0_4 = arith.constant 0 : index
    %c0_5 = arith.constant 0 : index
    %5 = vector.load %arg3[%c0_4, %c0_5] : memref<128x128xbf16, #tpu.memory_space<vmem>>, vector<128x128xbf16>
    %cst = arith.constant dense<0.000000e+00> : vector<128x128xf32>
    %6 = tpu.matmul %4, %5, %cst {dimension_numbers = #tpu.dot_dimension_numbers<[1], [0], [0], [1], [0, 0, 1, 1], [], []>} : vector<128x128xbf16>, vector<128x128xbf16>, vector<128x128xf32> -> vector<128x128xf32>
    %7 = arith.addf %3, %6 : vector<128x128xf32>
    %c0_6 = arith.constant 0 : index
    %c0_7 = arith.constant 0 : index
    %8 = vector.load %arg7[%c0_6, %c0_7] : memref<128x128xf32, #tpu.memory_space<vmem>>, vector<128x128xf32>
    tpu.vector_store %arg7[%c0_6, %c0_7], %7 {strides = array<i32>} : memref<128x128xf32, #tpu.memory_space<vmem>>, vector<128x128xf32>,
    %c0_i32_8 = arith.constant 0 : i32
    %9 = arith.cmpi eq, %arg1, %c0_i32_8 : i32
    %10 = arith.extui %9 : i1 to i32
    %c0_i32_9 = arith.constant 0 : i32
    %11 = arith.cmpi ne, %10, %c0_i32_9 : i32
    scf.if %11 {
      %c0_10 = arith.constant 0 : index
      %c0_11 = arith.constant 0 : index
      %12 = vector.load %arg7[%c0_10, %c0_11] : memref<128x128xf32, #tpu.memory_space<vmem>>, vector<128x128xf32>
      %13 = arith.truncf %12 : vector<128x128xf32> to vector<128x128xbf16>
      %c0_12 = arith.constant 0 : index
      %c0_13 = arith.constant 0 : index
      %14 = vector.load %arg5[%c0_12, %c0_13] : memref<128x128xbf16, #tpu.memory_space<vmem>>, vector<128x128xbf16>
      tpu.vector_store %arg5[%c0_12, %c0_13], %13 {strides = array<i32>} : memref<128x128xbf16, #tpu.memory_space<vmem>>, vector<128x128xbf16>,
      %c0_14 = arith.constant 0 : index
      %c0_15 = arith.constant 0 : index
      %15 = vector.load %arg4[%c0_14, %c0_15] : memref<128x128xf32, #tpu.memory_space<vmem>>, vector<128x128xf32>
      %16 = arith.addf %15, %12 : vector<128x128xf32>
      %cst_16 = arith.constant 0.333333343 : f32
      %17 = vector.broadcast %cst_16 : f32 to vector<128x128xf32>
      %18 = arith.mulf %16, %17 : vector<128x128xf32>
      %c0_17 = arith.constant 0 : index
      %c0_18 = arith.constant 0 : index
      %19 = vector.load %arg6[%c0_17, %c0_18] : memref<128x128xf32, #tpu.memory_space<vmem>>, vector<128x128xf32>
      tpu.vector_store %arg6[%c0_17, %c0_18], %18 {strides = array<i32>} : memref<128x128xf32, #tpu.memory_space<vmem>>, vector<128x128xf32>,
    } else {
    }
    return
  }
  func.func @transform_0(%arg0: i32, %arg1: i32) -> (i32, i32) {
    %c0_i32 = arith.constant 0 : i32
    return %arg0, %arg1 : i32, i32
  }
  func.func @transform_1(%arg0: i32, %arg1: i32) -> (i32, i32) {
    %c0_i32 = arith.constant 0 : i32
    %c0_i32_0 = arith.constant 0 : i32
    return %arg1, %c0_i32 : i32, i32
  }
  func.func @transform_2(%arg0: i32, %arg1: i32) -> (i32, i32) {
    %c0_i32 = arith.constant 0 : i32
    %c0_i32_0 = arith.constant 0 : i32
    return %arg0, %c0_i32 : i32, i32
  }
  func.func @transform_3(%arg0: i32, %arg1: i32) -> (i32, i32) {
    %c0_i32 = arith.constant 0 : i32
    %c0_i32_0 = arith.constant 0 : i32
    return %arg0, %c0_i32 : i32, i32
  }
  func.func @transform_4(%arg0: i32, %arg1: i32) -> (i32, i32) {
    %c0_i32 = arith.constant 0 : i32
    %c0_i32_0 = arith.constant 0 : i32
    return %arg0, %c0_i32 : i32, i32
  }
}

module attributes {stable_mosaic.version = 11 : i64} {
  func.func @_lgconv_kernel(%arg0: i32, %arg1: i32, %arg2: memref<128x128xbf16, #tpu.memory_space<vmem>>, %arg3: memref<128x128xbf16, #tpu.memory_space<vmem>>, %arg4: memref<128x128xf32, #tpu.memory_space<vmem>>, %arg5: memref<128x128xbf16, #tpu.memory_space<vmem>>, %arg6: memref<128x128xf32, #tpu.memory_space<vmem>>, %arg7: memref<128x128xf32, #tpu.memory_space<vmem>>) attributes {dimension_semantics = [#tpu.dimension_semantics<parallel>, #tpu.dimension_semantics<arbitrary>], iteration_bounds = array<i64: 1, 1>, scalar_prefetch = 0 : i64, scratch_operands = 1 : i64, tpu.core_type = #tpu.core_type<tc>, window_params = [{transform_indices = @transform_0, window_bounds = array<i64: 128, 128>}, {transform_indices = @transform_1, window_bounds = array<i64: 128, 128>}, {transform_indices = @transform_2, window_bounds = array<i64: 128, 128>}, {transform_indices = @transform_3, window_bounds = array<i64: 128, 128>}, {transform_indices = @transform_4, window_bounds = array<i64: 128, 128>}]} {
    %c0_i32 = arith.constant 0 : i32
    %0 = arith.cmpi eq, %arg1, %c0_i32 : i32
    %1 = arith.extui %0 : i1 to i32
    %c0_i32_0 = arith.constant 0 : i32
    %2 = arith.cmpi ne, %1, %c0_i32_0 : i32
    scf.if %2 {
      %cst_10 = arith.constant 0.000000e+00 : f32
      %12 = vector.broadcast %cst_10 : f32 to vector<128x128xf32>
      %c0_11 = arith.constant 0 : index
      %c0_12 = arith.constant 0 : index
      %13 = vector.load %arg7[%c0_11, %c0_12] : memref<128x128xf32, #tpu.memory_space<vmem>>, vector<128x128xf32>
      tpu.vector_store %arg7[%c0_11, %c0_12], %12 {strides = array<i32>} : memref<128x128xf32, #tpu.memory_space<vmem>>, vector<128x128xf32>,
    } else {
    }
    %c0 = arith.constant 0 : index
    %c0_1 = arith.constant 0 : index
    %3 = vector.load %arg7[%c0, %c0_1] : memref<128x128xf32, #tpu.memory_space<vmem>>, vector<128x128xf32>
    %c0_2 = arith.constant 0 : index
    %c0_3 = arith.constant 0 : index
    %4 = vector.load %arg2[%c0_2, %c0_3] : memref<128x128xbf16, #tpu.memory_space<vmem>>, vector<128x128xbf16>
    %c0_4 = arith.constant 0 : index
    %c0_5 = arith.constant 0 : index
    %5 = vector.load %arg3[%c0_4, %c0_5] : memref<128x128xbf16, #tpu.memory_space<vmem>>, vector<128x128xbf16>
    %cst = arith.constant dense<0.000000e+00> : vector<128x128xf32>
    %6 = tpu.matmul %4, %5, %cst {dimension_numbers = #tpu.dot_dimension_numbers<[1], [0], [0], [1], [0, 0, 1, 1], [], []>} : vector<128x128xbf16>, vector<128x128xbf16>, vector<128x128xf32> -> vector<128x128xf32>
    %7 = arith.addf %3, %6 : vector<128x128xf32>
    %c0_6 = arith.constant 0 : index
    %c0_7 = arith.constant 0 : index
    %8 = vector.load %arg7[%c0_6, %c0_7] : memref<128x128xf32, #tpu.memory_space<vmem>>, vector<128x128xf32>
    tpu.vector_store %arg7[%c0_6, %c0_7], %7 {strides = array<i32>} : memref<128x128xf32, #tpu.memory_space<vmem>>, vector<128x128xf32>,
    %c0_i32_8 = arith.constant 0 : i32
    %9 = arith.cmpi eq, %arg1, %c0_i32_8 : i32
    %10 = arith.extui %9 : i1 to i32
    %c0_i32_9 = arith.constant 0 : i32
    %11 = arith.cmpi ne, %10, %c0_i32_9 : i32
    scf.if %11 {
      %c0_10 = arith.constant 0 : index
      %c0_11 = arith.constant 0 : index
      %12 = vector.load %arg7[%c0_10, %c0_11] : memref<128x128xf32, #tpu.memory_space<vmem>>, vector<128x128xf32>
      %13 = arith.truncf %12 : vector<128x128xf32> to vector<128x128xbf16>
      %c0_12 = arith.constant 0 : index
      %c0_13 = arith.constant 0 : index
      %14 = vector.load %arg5[%c0_12, %c0_13] : memref<128x128xbf16, #tpu.memory_space<vmem>>, vector<128x128xbf16>
      tpu.vector_store %arg5[%c0_12, %c0_13], %13 {strides = array<i32>} : memref<128x128xbf16, #tpu.memory_space<vmem>>, vector<128x128xbf16>,
      %c0_14 = arith.constant 0 : index
      %c0_15 = arith.constant 0 : index
      %15 = vector.load %arg4[%c0_14, %c0_15] : memref<128x128xf32, #tpu.memory_space<vmem>>, vector<128x128xf32>
      %16 = arith.addf %15, %12 : vector<128x128xf32>
      %cst_16 = arith.constant 1.000000e+00 : f32
      %17 = vector.broadcast %cst_16 : f32 to vector<128x128xf32>
      %18 = arith.mulf %16, %17 : vector<128x128xf32>
      %c0_17 = arith.constant 0 : index
      %c0_18 = arith.constant 0 : index
      %19 = vector.load %arg6[%c0_17, %c0_18] : memref<128x128xf32, #tpu.memory_space<vmem>>, vector<128x128xf32>
      tpu.vector_store %arg6[%c0_17, %c0_18], %18 {strides = array<i32>} : memref<128x128xf32, #tpu.memory_space<vmem>>, vector<128x128xf32>,
    } else {
    }
    return
  }
  func.func @transform_0(%arg0: i32, %arg1: i32) -> (i32, i32) {
    %c0_i32 = arith.constant 0 : i32
    return %arg0, %arg1 : i32, i32
  }
  func.func @transform_1(%arg0: i32, %arg1: i32) -> (i32, i32) {
    %c0_i32 = arith.constant 0 : i32
    %c0_i32_0 = arith.constant 0 : i32
    return %arg1, %c0_i32 : i32, i32
  }
  func.func @transform_2(%arg0: i32, %arg1: i32) -> (i32, i32) {
    %c0_i32 = arith.constant 0 : i32
    %c0_i32_0 = arith.constant 0 : i32
    return %arg0, %c0_i32 : i32, i32
  }
  func.func @transform_3(%arg0: i32, %arg1: i32) -> (i32, i32) {
    %c0_i32 = arith.constant 0 : i32
    %c0_i32_0 = arith.constant 0 : i32
    return %arg0, %c0_i32 : i32, i32
  }
  func.func @transform_4(%arg0: i32, %arg1: i32) -> (i32, i32) {
    %c0_i32 = arith.constant 0 : i32
    %c0_i32_0 = arith.constant 0 : i32
    return %arg0, %c0_i32 : i32, i32
  }
}

</mosaic_0001>

<llo_original>
// kernel: recsys_gnn_forward.3
$region0: #{recsys_gnn_forward.3}
  #allocation0 [shape = 'u32[]', space=smem, size = 0x4, offset = 0x4, fixed_abs, tag = 'smem constant byte address 0x4 - core index']
  #allocation1 [shape = 'u32[144,128]{1,0:T(1,128)}', space=vmem, size = 0x12000, scoped, tag = 'internal scratch']
  %s0 = inlined_call_operand.vmem [shape: f32[128,128], index: 0, kind: input, shape index: {}]
  %s1 = inlined_call_operand.vmem [shape: f32[128,8], index: 1, kind: input, shape index: {}]
  %s2 = inlined_call_operand.vmem [shape: f32[8,128], index: 2, kind: input, shape index: {}]
  %s3 = inlined_call_operand.vmem [shape: f32[1,128], index: 3, kind: input, shape index: {}]
  %s4 = inlined_call_operand.vmem [shape: f32[128,128], index: 4, kind: output, shape index: {0}]
  %s5 = inlined_call_operand.vmem [shape: bf16[128,128], index: 5, kind: output, shape index: {1}]
  %6 = xla_tuple %s4, %s5
  %s7 = sld [smem:[#allocation0]]
  $region34: #{recsys_gnn_forward.3} parent=0
    _
  %s9 = ssub.s32 1, %s7
  %s10 = scalar_select 0, %s9, %s7
  // Predicated region
  $region2: #{recsys_gnn_forward.3} parent=0 // pred_check
    _
  $region3: #{recsys_gnn_forward.3} parent=0 // pred_check_branch
    %12 = sbr.rel (0) target = $region5
  $region4: #{recsys_gnn_forward.3} parent=0 // pred_region
    _
  $region5: #{recsys_gnn_forward.3} parent=0 // pred_fallthru
    _
  // Predicated region
  $region6: #{recsys_gnn_forward.3} parent=0 // pred_check
    _
  $region7: #{recsys_gnn_forward.3} parent=0 // pred_check_branch
    %14 = sbr.rel (0) target = $region9
  $region8: #{recsys_gnn_forward.3} parent=0 // pred_region
    _
  $region9: #{recsys_gnn_forward.3} parent=0 // pred_fallthru
    _
  // Predicated region
  $region10: #{recsys_gnn_forward.3} parent=0 // pred_check
    _
  $region11: #{recsys_gnn_forward.3} parent=0 // pred_check_branch
    %16 = sbr.rel (0) target = $region13
  $region12: #{recsys_gnn_forward.3} parent=0 // pred_region
    _
  $region13: #{recsys_gnn_forward.3} parent=0 // pred_fallthru
    _
  // Predicated region
  $region14: #{recsys_gnn_forward.3} parent=0 // pred_check
    _
  $region15: #{recsys_gnn_forward.3} parent=0 // pred_check_branch
    %18 = sbr.rel (0) target = $region17
  $region16: #{recsys_gnn_forward.3} parent=0 // pred_region
    _
  $region17: #{recsys_gnn_forward.3} parent=0 // pred_fallthru
    _
  %v19 = vld [vmem:[%s0] sm:$0xff]
  %v20 = vld [vmem:[%s0 + $0x8] sm:$0xff]
  %v21 = vld [vmem:[%s0 + $0x10] sm:$0xff]
  %v22 = vld [vmem:[%s0 + $0x18] sm:$0xff]
  %v23 = vld [vmem:[%s0 + $0x20] sm:$0xff]
  %v24 = vld [vmem:[%s0 + $0x28] sm:$0xff]
  %v25 = vld [vmem:[%s0 + $0x30] sm:$0xff]
  %v26 = vld [vmem:[%s0 + $0x38] sm:$0xff]
  %v27 = vld [vmem:[%s0 + $0x40] sm:$0xff]
  %v28 = vld [vmem:[%s0 + $0x48] sm:$0xff]
  %v29 = vld [vmem:[%s0 + $0x50] sm:$0xff]
  %v30 = vld [vmem:[%s0 + $0x58] sm:$0xff]
  %v31 = vld [vmem:[%s0 + $0x60] sm:$0xff]
  %v32 = vld [vmem:[%s0 + $0x68] sm:$0xff]
  %v33 = vld [vmem:[%s0 + $0x70] sm:$0xff]
  %v34 = vld [vmem:[%s0 + $0x78] sm:$0xff]
  %v35 = vld [vmem:[%s1] sm:$0xff]
  %v36 = vld [vmem:[%s1 + $0x8] sm:$0xff]
  %v37 = vld [vmem:[%s1 + $0x10] sm:$0xff]
  %v38 = vld [vmem:[%s1 + $0x18] sm:$0xff]
  %v39 = vld [vmem:[%s1 + $0x20] sm:$0xff]
  %v40 = vld [vmem:[%s1 + $0x28] sm:$0xff]
  %v41 = vld [vmem:[%s1 + $0x30] sm:$0xff]
  %v42 = vld [vmem:[%s1 + $0x38] sm:$0xff]
  %v43 = vld [vmem:[%s1 + $0x40] sm:$0xff]
  %v44 = vld [vmem:[%s1 + $0x48] sm:$0xff]
  %v45 = vld [vmem:[%s1 + $0x50] sm:$0xff]
  %v46 = vld [vmem:[%s1 + $0x58] sm:$0xff]
  %v47 = vld [vmem:[%s1 + $0x60] sm:$0xff]
  %v48 = vld [vmem:[%s1 + $0x68] sm:$0xff]
  %v49 = vld [vmem:[%s1 + $0x70] sm:$0xff]
  %v50 = vld [vmem:[%s1 + $0x78] sm:$0xff]
  %v51 = vld [vmem:[%s2] sm:$0xff]
  %vm52 = vcmask 64512
  %v54 = vsel %vm52, %v35, 0
  %v57 = vsel %vm52, %v36, 0
  %v60 = vsel %vm52, %v37, 0
  %v63 = vsel %vm52, %v38, 0
  %v66 = vsel %vm52, %v39, 0
  %v69 = vsel %vm52, %v40, 0
  %v72 = vsel %vm52, %v41, 0
  %v75 = vsel %vm52, %v42, 0
  %v78 = vsel %vm52, %v43, 0
  %v81 = vsel %vm52, %v44, 0
  %v84 = vsel %vm52, %v45, 0
  %v87 = vsel %vm52, %v46, 0
  %v90 = vsel %vm52, %v47, 0
  %v93 = vsel %vm52, %v48, 0
  %v96 = vsel %vm52, %v49, 0
  %v99 = vsel %vm52, %v50, 0
  %101 = vmatprep.subr.mxu0 0.0
  %102 = vmatpush1.msra.mxu0 %v51
  %103 = vmatprep.subr.mxu0 0.0
  %104 = vmatpush1.msra.mxu0 0.0
  %105 = vmatprep.subr.mxu0 0.0
  %106 = vmatpush1.msra.mxu0 0.0
  %107 = vmatprep.subr.mxu0 0.0
  %108 = vmatpush1.msra.mxu0 0.0
  %109 = vmatprep.subr.mxu0 0.0
  %110 = vmatpush1.msra.mxu0 0.0
  %111 = vmatprep.subr.mxu0 0.0
  %112 = vmatpush1.msra.mxu0 0.0
  %113 = vmatprep.subr.mxu0 0.0
  %114 = vmatpush1.msra.mxu0 0.0
  %115 = vmatprep.subr.mxu0 0.0
  %116 = vmatpush1.msra.mxu0 0.0
  %117 = vmatprep.subr.mxu0 0.0
  %118 = vmatpush1.msra.mxu0 0.0
  %119 = vmatprep.subr.mxu0 0.0
  %120 = vmatpush1.msra.mxu0 0.0
  %121 = vmatprep.subr.mxu0 0.0
  %122 = vmatpush1.msra.mxu0 0.0
  %123 = vmatprep.subr.mxu0 0.0
  %124 = vmatpush1.msra.mxu0 0.0
  %125 = vmatprep.subr.mxu0 0.0
  %126 = vmatpush1.msra.mxu0 0.0
  %127 = vmatprep.subr.mxu0 0.0
  %128 = vmatpush1.msra.mxu0 0.0
  %129 = vmatprep.subr.mxu0 0.0
  %130 = vmatpush1.msra.mxu0 0.0
  %131 = vmatprep.subr.mxu0 0.0
  %132 = vmatpush1.msra.mxu0 0.0
  %133 = vmatprep.subr.mxu0 0.0
  %134 = vmatpush1.msra.mxu0 0.0
  %135 = vmatprep.subr.mxu0 0.0
  %136 = vmatpush1.msra.mxu0 0.0
  %137 = vmatprep.subr.mxu0 0.0
  %138 = vmatpush1.msra.mxu0 0.0
  %139 = vmatprep.subr.mxu0 0.0
  %140 = vmatpush1.msra.mxu0 0.0
  %141 = vmatprep.subr.mxu0 0.0
  %142 = vmatpush1.msra.mxu0 0.0
  %143 = vmatprep.subr.mxu0 0.0
  %144 = vmatpush1.msra.mxu0 0.0
  %145 = vmatprep.subr.mxu0 0.0
  %146 = vmatpush1.msra.mxu0 0.0
  %147 = vmatprep.subr.mxu0 0.0
  %148 = vmatpush1.msra.mxu0 0.0
  %149 = vmatprep.subr.mxu0 0.0
  %150 = vmatpush1.msra.mxu0 0.0
  %151 = vmatprep.subr.mxu0 0.0
  %152 = vmatpush1.msra.mxu0 0.0
  %153 = vmatprep.subr.mxu0 0.0
  %154 = vmatpush1.msra.mxu0 0.0
  %155 = vmatprep.subr.mxu0 0.0
  %156 = vmatpush1.msra.mxu0 0.0
  %157 = vmatprep.subr.mxu0 0.0
  %158 = vmatpush1.msra.mxu0 0.0
  %159 = vmatprep.subr.mxu0 0.0
  %160 = vmatpush1.msra.mxu0 0.0
  %161 = vmatprep.subr.mxu0 0.0
  %162 = vmatpush1.msra.mxu0 0.0
  %163 = vmatprep.subr.mxu0 0.0
  %164 = vmatpush1.msra.mxu0 0.0
  %165 = vmatprep.mubr.f32.mxu0 0.0
  %166 = vmatmul.mubr.f32.gmra.mrb[0].mxu0 %v54
  %v167 = vpop.f32.mrb[0].mxu0
  %v168 = vadd.f32 0.0, %v167
  %v169 = vpop.f32.mrb[0].mxu0
  %170 = vmatprep.mubr.f32.mxu0 0.0
  %171 = vmatmul.mubr.f32.gmra.mrb[0].mxu0 %v57
  %v172 = vpop.f32.mrb[0].mxu0
  %v173 = vadd.f32 0.0, %v172
  %v174 = vpop.f32.mrb[0].mxu0
  %175 = vmatprep.mubr.f32.mxu0 0.0
  %176 = vmatmul.mubr.f32.gmra.mrb[0].mxu0 %v60
  %v177 = vpop.f32.mrb[0].mxu0
  %v178 = vadd.f32 0.0, %v177
  %v179 = vpop.f32.mrb[0].mxu0
  %180 = vmatprep.mubr.f32.mxu0 0.0
  %181 = vmatmul.mubr.f32.gmra.mrb[0].mxu0 %v63
  %v182 = vpop.f32.mrb[0].mxu0
  %v183 = vadd.f32 0.0, %v182
  %v184 = vpop.f32.mrb[0].mxu0
  %185 = vmatprep.mubr.f32.mxu0 0.0
  %186 = vmatmul.mubr.f32.gmra.mrb[0].mxu0 %v66
  %v187 = vpop.f32.mrb[0].mxu0
  %v188 = vadd.f32 0.0, %v187
  %v189 = vpop.f32.mrb[0].mxu0
  %190 = vmatprep.mubr.f32.mxu0 0.0
  %191 = vmatmul.mubr.f32.gmra.mrb[0].mxu0 %v69
  %v192 = vpop.f32.mrb[0].mxu0
  %v193 = vadd.f32 0.0, %v192
  %v194 = vpop.f32.mrb[0].mxu0
  %195 = vmatprep.mubr.f32.mxu0 0.0
  %196 = vmatmul.mubr.f32.gmra.mrb[0].mxu0 %v72
  %v197 = vpop.f32.mrb[0].mxu0
  %v198 = vadd.f32 0.0, %v197
  %v199 = vpop.f32.mrb[0].mxu0
  %200 = vmatprep.mubr.f32.mxu0 0.0
  %201 = vmatmul.mubr.f32.gmra.mrb[0].mxu0 %v75
  %v202 = vpop.f32.mrb[0].mxu0
  %v203 = vadd.f32 0.0, %v202
  %v204 = vpop.f32.mrb[0].mxu0
  %205 = vmatprep.mubr.f32.mxu0 0.0
  %206 = vmatmul.mubr.f32.gmra.mrb[0].mxu0 %v78
  %v207 = vpop.f32.mrb[0].mxu0
  %v208 = vadd.f32 0.0, %v207
  %v209 = vpop.f32.mrb[0].mxu0
  %210 = vmatprep.mubr.f32.mxu0 0.0
  %211 = vmatmul.mubr.f32.gmra.mrb[0].mxu0 %v81
  %v212 = vpop.f32.mrb[0].mxu0
  %v213 = vadd.f32 0.0, %v212
  %v214 = vpop.f32.mrb[0].mxu0
  %215 = vmatprep.mubr.f32.mxu0 0.0
  %216 = vmatmul.mubr.f32.gmra.mrb[0].mxu0 %v84
  %v217 = vpop.f32.mrb[0].mxu0
  %v218 = vadd.f32 0.0, %v217
  %v219 = vpop.f32.mrb[0].mxu0
  %220 = vmatprep.mubr.f32.mxu0 0.0
  %221 = vmatmul.mubr.f32.gmra.mrb[0].mxu0 %v87
  %v222 = vpop.f32.mrb[0].mxu0
  %v223 = vadd.f32 0.0, %v222
  %v224 = vpop.f32.mrb[0].mxu0
  %225 = vmatprep.mubr.f32.mxu0 0.0
  %226 = vmatmul.mubr.f32.gmra.mrb[0].mxu0 %v90
  %v227 = vpop.f32.mrb[0].mxu0
  %v228 = vadd.f32 0.0, %v227
  %v229 = vpop.f32.mrb[0].mxu0
  %230 = vmatprep.mubr.f32.mxu0 0.0
  %231 = vmatmul.mubr.f32.gmra.mrb[0].mxu0 %v93
  %v232 = vpop.f32.mrb[0].mxu0
  %v233 = vadd.f32 0.0, %v232
  %v234 = vpop.f32.mrb[0].mxu0
  %235 = vmatprep.mubr.f32.mxu0 0.0
  %236 = vmatmul.mubr.f32.gmra.mrb[0].mxu0 %v96
  %v237 = vpop.f32.mrb[0].mxu0
  %v238 = vadd.f32 0.0, %v237
  %v239 = vpop.f32.mrb[0].mxu0
  %240 = vmatprep.mubr.f32.mxu0 0.0
  %241 = vmatmul.mubr.f32.gmra.mrb[0].mxu0 %v99
  %v242 = vpop.f32.mrb[0].mxu0
  %v243 = vadd.f32 0.0, %v242
  %v244 = vpop.f32.mrb[0].mxu0
  %245 = vdwg.mxu0
  %v246 = vadd.f32 %v19, %v168
  %v247 = vadd.f32 %v20, %v173
  %v248 = vadd.f32 %v21, %v178
  %v249 = vadd.f32 %v22, %v183
  %v250 = vadd.f32 %v23, %v188
  %v251 = vadd.f32 %v24, %v193
  %v252 = vadd.f32 %v25, %v198
  %v253 = vadd.f32 %v26, %v203
  %v254 = vadd.f32 %v27, %v208
  %v255 = vadd.f32 %v28, %v213
  %v256 = vadd.f32 %v29, %v218
  %v257 = vadd.f32 %v30, %v223
  %v258 = vadd.f32 %v31, %v228
  %v259 = vadd.f32 %v32, %v233
  %v260 = vadd.f32 %v33, %v238
  %v261 = vadd.f32 %v34, %v243
  %v262 = vld [vmem:[%s3] sm:$0x1]
  %v264 = vlaneseq
  %v265 = vshrl.u32 %v264, 7
  %v266 = vsub.s32 0, %v265
  %v267 = vrot.slane %v262, %v266
  %v269 = vadd.f32 %v246, %v267
  %v270 = vadd.f32 %v247, %v267
  %v271 = vadd.f32 %v248, %v267
  %v272 = vadd.f32 %v249, %v267
  %v273 = vadd.f32 %v250, %v267
  %v274 = vadd.f32 %v251, %v267
  %v275 = vadd.f32 %v252, %v267
  %v276 = vadd.f32 %v253, %v267
  %v277 = vadd.f32 %v254, %v267
  %v278 = vadd.f32 %v255, %v267
  %v279 = vadd.f32 %v256, %v267
  %v280 = vadd.f32 %v257, %v267
  %v281 = vadd.f32 %v258, %v267
  %v282 = vadd.f32 %v259, %v267
  %v283 = vadd.f32 %v260, %v267
  %v284 = vadd.f32 %v261, %v267
  %285 = vst [vmem:[%s4] sm:$0xff] %v269
  %286 = vst [vmem:[%s4 + $0x8] sm:$0xff] %v270
  %287 = vst [vmem:[%s4 + $0x10] sm:$0xff] %v271
  %288 = vst [vmem:[%s4 + $0x18] sm:$0xff] %v272
  %289 = vst [vmem:[%s4 + $0x20] sm:$0xff] %v273
  %290 = vst [vmem:[%s4 + $0x28] sm:$0xff] %v274
  %291 = vst [vmem:[%s4 + $0x30] sm:$0xff] %v275
  %292 = vst [vmem:[%s4 + $0x38] sm:$0xff] %v276
  %293 = vst [vmem:[%s4 + $0x40] sm:$0xff] %v277
  %294 = vst [vmem:[%s4 + $0x48] sm:$0xff] %v278
  %295 = vst [vmem:[%s4 + $0x50] sm:$0xff] %v279
  %296 = vst [vmem:[%s4 + $0x58] sm:$0xff] %v280
  %297 = vst [vmem:[%s4 + $0x60] sm:$0xff] %v281
  %298 = vst [vmem:[%s4 + $0x68] sm:$0xff] %v282
  %299 = vst [vmem:[%s4 + $0x70] sm:$0xff] %v283
  %300 = vst [vmem:[%s4 + $0x78] sm:$0xff] %v284
  %v301 = vpack.c.bf16 %v270, %v269
  %v302 = vpack.c.bf16 %v272, %v271
  %v303 = vpack.c.bf16 %v274, %v273
  %v304 = vpack.c.bf16 %v276, %v275
  %v305 = vpack.c.bf16 %v278, %v277
  %v306 = vpack.c.bf16 %v280, %v279
  %v307 = vpack.c.bf16 %v282, %v281
  %v308 = vpack.c.bf16 %v284, %v283
  %v317 = vunpack.c.l.b16 %v301
  %v318 = vunpack.c.h.b16 %v301
  %v319 = vunpack.c.l.b16 %v302
  %v320 = vunpack.c.h.b16 %v302
  %v321 = vunpack.c.l.b16 %v303
  %v322 = vunpack.c.h.b16 %v303
  %v323 = vunpack.c.l.b16 %v304
  %v324 = vunpack.c.h.b16 %v304
  %v325 = vunpack.c.l.b16 %v305
  %v326 = vunpack.c.h.b16 %v305
  %v327 = vunpack.c.l.b16 %v306
  %v328 = vunpack.c.h.b16 %v306
  %v329 = vunpack.c.l.b16 %v307
  %v330 = vunpack.c.h.b16 %v307
  %v331 = vunpack.c.l.b16 %v308
  %v332 = vunpack.c.h.b16 %v308
  %v333 = vpack.c.b16 %v317, %v317
  %v334 = vpack.c.b16 %v318, %v318
  %v335 = vpack.c.b16 %v319, %v319
  %v336 = vpack.c.b16 %v320, %v320
  %v337 = vpack.c.b16 %v321, %v321
  %v338 = vpack.c.b16 %v322, %v322
  %v339 = vpack.c.b16 %v323, %v323
  %v340 = vpack.c.b16 %v324, %v324
  %v341 = vpack.c.b16 %v325, %v325
  %v342 = vpack.c.b16 %v326, %v326
  %v343 = vpack.c.b16 %v327, %v327
  %v344 = vpack.c.b16 %v328, %v328
  %v345 = vpack.c.b16 %v329, %v329
  %v346 = vpack.c.b16 %v330, %v330
  %v347 = vpack.c.b16 %v331, %v331
  %v348 = vpack.c.b16 %v332, %v332
  %365 = vst [vmem:[%s5] sm:$0xf] %v333
  %366 = vst [vmem:[%s5 + $0x4] sm:$0xf] %v334
  %367 = vst [vmem:[%s5 + $0x8] sm:$0xf] %v335
  %368 = vst [vmem:[%s5 + $0xc] sm:$0xf] %v336
  %369 = vst [vmem:[%s5 + $0x10] sm:$0xf] %v337
  %370 = vst [vmem:[%s5 + $0x14] sm:$0xf] %v338
  %371 = vst [vmem:[%s5 + $0x18] sm:$0xf] %v339
  %372 = vst [vmem:[%s5 + $0x1c] sm:$0xf] %v340
  %373 = vst [vmem:[%s5 + $0x20] sm:$0xf] %v341
  %374 = vst [vmem:[%s5 + $0x24] sm:$0xf] %v342
  %375 = vst [vmem:[%s5 + $0x28] sm:$0xf] %v343
  %376 = vst [vmem:[%s5 + $0x2c] sm:$0xf] %v344
  %377 = vst [vmem:[%s5 + $0x30] sm:$0xf] %v345
  %378 = vst [vmem:[%s5 + $0x34] sm:$0xf] %v346
  %379 = vst [vmem:[%s5 + $0x38] sm:$0xf] %v347
  %380 = vst [vmem:[%s5 + $0x3c] sm:$0xf] %v348
  // Predicated region
  $region18: #{recsys_gnn_forward.3} parent=0 // pred_check
    _
  $region19: #{recsys_gnn_forward.3} parent=0 // pred_check_branch
    %382 = sbr.rel (0) target = $region21
  $region20: #{recsys_gnn_forward.3} parent=0 // pred_region
    _
  $region21: #{recsys_gnn_forward.3} parent=0 // pred_fallthru
    _
  // Predicated region
  $region22: #{recsys_gnn_forward.3} parent=0 // pred_check
    _
  $region23: #{recsys_gnn_forward.3} parent=0 // pred_check_branch
    %384 = sbr.rel (0) target = $region25
  $region24: #{recsys_gnn_forward.3} parent=0 // pred_region
    _
  $region25: #{recsys_gnn_forward.3} parent=0 // pred_fallthru
    _
  // Predicated region
  $region26: #{recsys_gnn_forward.3} parent=0 // pred_check
    _
  $region27: #{recsys_gnn_forward.3} parent=0 // pred_check_branch
    %386 = sbr.rel (0) target = $region29
  $region28: #{recsys_gnn_forward.3} parent=0 // pred_region
    _
  $region29: #{recsys_gnn_forward.3} parent=0 // pred_fallthru
    _
  // Predicated region
  $region30: #{recsys_gnn_forward.3} parent=0 // pred_check
    _
  $region31: #{recsys_gnn_forward.3} parent=0 // pred_check_branch
    %388 = sbr.rel (0) target = $region33
  $region32: #{recsys_gnn_forward.3} parent=0 // pred_region
    _
  $region33: #{recsys_gnn_forward.3} parent=0 // pred_fallthru
    _

// kernel: recsys_gnn_forward.4
$region0: #{recsys_gnn_forward.4}
  #allocation0 [shape = 'u32[]', space=smem, size = 0x4, offset = 0x4, fixed_abs, tag = 'smem constant byte address 0x4 - core index']
  #allocation1 [shape = 'u32[144,128]{1,0:T(1,128)}', space=vmem, size = 0x12000, scoped, tag = 'internal scratch']
  #allocation2 [shape = 'f32[128,128]{1,0:T(8,128)}', space=vmem, size = 0x10000, scoped, tag = 'scratch operand']
  %s0 = inlined_call_operand.vmem [shape: bf16[128,128], index: 0, kind: input, shape index: {}]
  %s1 = inlined_call_operand.vmem [shape: bf16[128,128], index: 1, kind: input, shape index: {}]
  %s2 = inlined_call_operand.vmem [shape: f32[128,128], index: 2, kind: input, shape index: {}, may-alias: {2,4}]
  %s3 = inlined_call_operand.vmem [shape: bf16[128,128], index: 3, kind: output, shape index: {0}]
  %s4 = inlined_call_operand.vmem [shape: f32[128,128], index: 4, kind: output, shape index: {1}, may-alias: {2,4}]
  %5 = xla_tuple %s3, %s4
  %s6 = sld [smem:[#allocation0]]
  $region38: #{recsys_gnn_forward.4} parent=0
    _
  %s8 = ssub.s32 1, %s6
  %s9 = scalar_select 0, %s8, %s6
  // Predicated region
  $region2: #{recsys_gnn_forward.4} parent=0 // pred_check
    _
  $region3: #{recsys_gnn_forward.4} parent=0 // pred_check_branch
    %11 = sbr.rel (0) target = $region5
  $region4: #{recsys_gnn_forward.4} parent=0 // pred_region
    _
  $region5: #{recsys_gnn_forward.4} parent=0 // pred_fallthru
    _
  // Predicated region
  $region6: #{recsys_gnn_forward.4} parent=0 // pred_check
    _
  $region7: #{recsys_gnn_forward.4} parent=0 // pred_check_branch
    %13 = sbr.rel (0) target = $region9
  $region8: #{recsys_gnn_forward.4} parent=0 // pred_region
    _
  $region9: #{recsys_gnn_forward.4} parent=0 // pred_fallthru
    _
  // Predicated region
  $region10: #{recsys_gnn_forward.4} parent=0 // pred_check
    _
  $region11: #{recsys_gnn_forward.4} parent=0 // pred_check_branch
    %15 = sbr.rel (0) target = $region13
  $region12: #{recsys_gnn_forward.4} parent=0 // pred_region
    _
  $region13: #{recsys_gnn_forward.4} parent=0 // pred_fallthru
    _
  %p17 = scmp.eq.s32.totalorder 0, 0
  // Predicated region
  $region14: #{recsys_gnn_forward.4} parent=0 // pred_check
    %p18 = pneg %p17
  $region15: #{recsys_gnn_forward.4} parent=0 // pred_check_branch
    %20 = sbr.rel (%p18) target = $region17
  $region16: #{recsys_gnn_forward.4} parent=0 // pred_region
    %21 = vst [vmem:[#allocation2] sm:$0xff] 0.0
    %22 = vst [vmem:[#allocation2 + $0x8] sm:$0xff] 0.0
    %23 = vst [vmem:[#allocation2 + $0x10] sm:$0xff] 0.0
    %24 = vst [vmem:[#allocation2 + $0x18] sm:$0xff] 0.0
    %25 = vst [vmem:[#allocation2 + $0x20] sm:$0xff] 0.0
    %26 = vst [vmem:[#allocation2 + $0x28] sm:$0xff] 0.0
    %27 = vst [vmem:[#allocation2 + $0x30] sm:$0xff] 0.0
    %28 = vst [vmem:[#allocation2 + $0x38] sm:$0xff] 0.0
    %29 = vst [vmem:[#allocation2 + $0x40] sm:$0xff] 0.0
    %30 = vst [vmem:[#allocation2 + $0x48] sm:$0xff] 0.0
    %31 = vst [vmem:[#allocation2 + $0x50] sm:$0xff] 0.0
    %32 = vst [vmem:[#allocation2 + $0x58] sm:$0xff] 0.0
    %33 = vst [vmem:[#allocation2 + $0x60] sm:$0xff] 0.0
    %34 = vst [vmem:[#allocation2 + $0x68] sm:$0xff] 0.0
    %35 = vst [vmem:[#allocation2 + $0x70] sm:$0xff] 0.0
    %36 = vst [vmem:[#allocation2 + $0x78] sm:$0xff] 0.0
  $region17: #{recsys_gnn_forward.4} parent=0 // pred_fallthru
    _
  %v37 = vld [vmem:[#allocation2] sm:$0xff]
  %v38 = vld [vmem:[#allocation2 + $0x8] sm:$0xff]
  %v39 = vld [vmem:[#allocation2 + $0x10] sm:$0xff]
  %v40 = vld [vmem:[#allocation2 + $0x18] sm:$0xff]
  %v41 = vld [vmem:[#allocation2 + $0x20] sm:$0xff]
  %v42 = vld [vmem:[#allocation2 + $0x28] sm:$0xff]
  %v43 = vld [vmem:[#allocation2 + $0x30] sm:$0xff]
  %v44 = vld [vmem:[#allocation2 + $0x38] sm:$0xff]
  %v45 = vld [vmem:[#allocation2 + $0x40] sm:$0xff]
  %v46 = vld [vmem:[#allocation2 + $0x48] sm:$0xff]
  %v47 = vld [vmem:[#allocation2 + $0x50] sm:$0xff]
  %v48 = vld [vmem:[#allocation2 + $0x58] sm:$0xff]
  %v49 = vld [vmem:[#allocation2 + $0x60] sm:$0xff]
  %v50 = vld [vmem:[#allocation2 + $0x68] sm:$0xff]
  %v51 = vld [vmem:[#allocation2 + $0x70] sm:$0xff]
  %v52 = vld [vmem:[#allocation2 + $0x78] sm:$0xff]
  %v53 = vld [vmem:[%s0] sm:$0xf]
  %v54 = vld [vmem:[%s0 + $0x4] sm:$0xf]
  %v55 = vld [vmem:[%s0 + $0x8] sm:$0xf]
  %v56 = vld [vmem:[%s0 + $0xc] sm:$0xf]
  %v57 = vld [vmem:[%s0 + $0x10] sm:$0xf]
  %v58 = vld [vmem:[%s0 + $0x14] sm:$0xf]
  %v59 = vld [vmem:[%s0 + $0x18] sm:$0xf]
  %v60 = vld [vmem:[%s0 + $0x1c] sm:$0xf]
  %v61 = vld [vmem:[%s0 + $0x20] sm:$0xf]
  %v62 = vld [vmem:[%s0 + $0x24] sm:$0xf]
  %v63 = vld [vmem:[%s0 + $0x28] sm:$0xf]
  %v64 = vld [vmem:[%s0 + $0x2c] sm:$0xf]
  %v65 = vld [vmem:[%s0 + $0x30] sm:$0xf]
  %v66 = vld [vmem:[%s0 + $0x34] sm:$0xf]
  %v67 = vld [vmem:[%s0 + $0x38] sm:$0xf]
  %v68 = vld [vmem:[%s0 + $0x3c] sm:$0xf]
  %v69 = vld [vmem:[%s1] sm:$0xf]
  %v70 = vld [vmem:[%s1 + $0x4] sm:$0xf]
  %v71 = vld [vmem:[%s1 + $0x8] sm:$0xf]
  %v72 = vld [vmem:[%s1 + $0xc] sm:$0xf]
  %v73 = vld [vmem:[%s1 + $0x10] sm:$0xf]
  %v74 = vld [vmem:[%s1 + $0x14] sm:$0xf]
  %v75 = vld [vmem:[%s1 + $0x18] sm:$0xf]
  %v76 = vld [vmem:[%s1 + $0x1c] sm:$0xf]
  %v77 = vld [vmem:[%s1 + $0x20] sm:$0xf]
  %v78 = vld [vmem:[%s1 + $0x24] sm:$0xf]
  %v79 = vld [vmem:[%s1 + $0x28] sm:$0xf]
  %v80 = vld [vmem:[%s1 + $0x2c] sm:$0xf]
  %v81 = vld [vmem:[%s1 + $0x30] sm:$0xf]
  %v82 = vld [vmem:[%s1 + $0x34] sm:$0xf]
  %v83 = vld [vmem:[%s1 + $0x38] sm:$0xf]
  %v84 = vld [vmem:[%s1 + $0x3c] sm:$0xf]
  %v101 = vunpack.c.l.b16 %v53
  %v102 = vunpack.c.l.b16 %v54
  %v103 = vunpack.c.l.b16 %v55
  %v104 = vunpack.c.l.b16 %v56
  %v105 = vunpack.c.l.b16 %v57
  %v106 = vunpack.c.l.b16 %v58
  %v107 = vunpack.c.l.b16 %v59
  %v108 = vunpack.c.l.b16 %v60
  %v109 = vunpack.c.l.b16 %v61
  %v110 = vunpack.c.l.b16 %v62
  %v111 = vunpack.c.l.b16 %v63
  %v112 = vunpack.c.l.b16 %v64
  %v113 = vunpack.c.l.b16 %v65
  %v114 = vunpack.c.l.b16 %v66
  %v115 = vunpack.c.l.b16 %v67
  %v116 = vunpack.c.l.b16 %v68
  %v117 = vpack.c.b16 %v102, %v101
  %v118 = vpack.c.b16 %v104, %v103
  %v119 = vpack.c.b16 %v106, %v105
  %v120 = vpack.c.b16 %v108, %v107
  %v121 = vpack.c.b16 %v110, %v109
  %v122 = vpack.c.b16 %v112, %v111
  %v123 = vpack.c.b16 %v114, %v113
  %v124 = vpack.c.b16 %v116, %v115
  %v149 = vunpack.c.l.b16 %v69
  %v150 = vunpack.c.l.b16 %v70
  %v151 = vunpack.c.l.b16 %v71
  %v152 = vunpack.c.l.b16 %v72
  %v153 = vunpack.c.l.b16 %v73
  %v154 = vunpack.c.l.b16 %v74
  %v155 = vunpack.c.l.b16 %v75
  %v156 = vunpack.c.l.b16 %v76
  %v157 = vunpack.c.l.b16 %v77
  %v158 = vunpack.c.l.b16 %v78
  %v159 = vunpack.c.l.b16 %v79
  %v160 = vunpack.c.l.b16 %v80
  %v161 = vunpack.c.l.b16 %v81
  %v162 = vunpack.c.l.b16 %v82
  %v163 = vunpack.c.l.b16 %v83
  %v164 = vunpack.c.l.b16 %v84
  %v165 = vpack.c.b16 %v150, %v149
  %v166 = vpack.c.b16 %v152, %v151
  %v167 = vpack.c.b16 %v154, %v153
  %v168 = vpack.c.b16 %v156, %v155
  %v169 = vpack.c.b16 %v158, %v157
  %v170 = vpack.c.b16 %v160, %v159
  %v171 = vpack.c.b16 %v162, %v161
  %v172 = vpack.c.b16 %v164, %v163
  %181 = vmatprep.subr.bf16.mxu0 0
  %182 = vmatpush1.bf16.msra.mxu0 %v165
  %183 = vmatprep.subr.bf16.mxu0 0
  %184 = vmatpush1.bf16.msra.mxu0 %v166
  %185 = vmatprep.subr.bf16.mxu0 0
  %186 = vmatpush1.bf16.msra.mxu0 %v167
  %187 = vmatprep.subr.bf16.mxu0 0
  %188 = vmatpush1.bf16.msra.mxu0 %v168
  %189 = vmatprep.subr.bf16.mxu0 0
  %190 = vmatpush1.bf16.msra.mxu0 %v169
  %191 = vmatprep.subr.bf16.mxu0 0
  %192 = vmatpush1.bf16.msra.mxu0 %v170
  %193 = vmatprep.subr.bf16.mxu0 0
  %194 = vmatpush1.bf16.msra.mxu0 %v171
  %195 = vmatprep.subr.bf16.mxu0 0
  %196 = vmatpush1.bf16.msra.mxu0 %v172
  %197 = vmatprep.subr.bf16.mxu0 0
  %198 = vmatpush1.bf16.msra.mxu0 0
  %199 = vmatprep.subr.bf16.mxu0 0
  %200 = vmatpush1.bf16.msra.mxu0 0
  %201 = vmatprep.subr.bf16.mxu0 0
  %202 = vmatpush1.bf16.msra.mxu0 0
  %203 = vmatprep.subr.bf16.mxu0 0
  %204 = vmatpush1.bf16.msra.mxu0 0
  %205 = vmatprep.subr.bf16.mxu0 0
  %206 = vmatpush1.bf16.msra.mxu0 0
  %207 = vmatprep.subr.bf16.mxu0 0
  %208 = vmatpush1.bf16.msra.mxu0 0
  %209 = vmatprep.subr.bf16.mxu0 0
  %210 = vmatpush1.bf16.msra.mxu0 0
  %211 = vmatprep.subr.bf16.mxu0 0
  %212 = vmatpush1.bf16.msra.mxu0 0
  %213 = vmatprep.mubr.bf16.mxu0 0
  %214 = vmatmul.mubr.bf16.gmra.mrb[0].mxu0 %v117
  %v215 = vpop.f32.mrb[0].mxu0
  %v216 = vadd.f32 0.0, %v215
  %v217 = vpop.f32.mrb[0].mxu0
  %v218 = vpop.f32.mrb[0].mxu0
  %v219 = vadd.f32 0.0, %v218
  %v220 = vpop.f32.mrb[0].mxu0
  %221 = vmatprep.mubr.bf16.mxu0 0
  %222 = vmatmul.mubr.bf16.gmra.mrb[0].mxu0 %v118
  %v223 = vpop.f32.mrb[0].mxu0
  %v224 = vadd.f32 0.0, %v223
  %v225 = vpop.f32.mrb[0].mxu0
  %v226 = vpop.f32.mrb[0].mxu0
  %v227 = vadd.f32 0.0, %v226
  %v228 = vpop.f32.mrb[0].mxu0
  %229 = vmatprep.mubr.bf16.mxu0 0
  %230 = vmatmul.mubr.bf16.gmra.mrb[0].mxu0 %v119
  %v231 = vpop.f32.mrb[0].mxu0
  %v232 = vadd.f32 0.0, %v231
  %v233 = vpop.f32.mrb[0].mxu0
  %v234 = vpop.f32.mrb[0].mxu0
  %v235 = vadd.f32 0.0, %v234
  %v236 = vpop.f32.mrb[0].mxu0
  %237 = vmatprep.mubr.bf16.mxu0 0
  %238 = vmatmul.mubr.bf16.gmra.mrb[0].mxu0 %v120
  %v239 = vpop.f32.mrb[0].mxu0
  %v240 = vadd.f32 0.0, %v239
  %v241 = vpop.f32.mrb[0].mxu0
  %v242 = vpop.f32.mrb[0].mxu0
  %v243 = vadd.f32 0.0, %v242
  %v244 = vpop.f32.mrb[0].mxu0
  %245 = vmatprep.mubr.bf16.mxu0 0
  %246 = vmatmul.mubr.bf16.gmra.mrb[0].mxu0 %v121
  %v247 = vpop.f32.mrb[0].mxu0
  %v248 = vadd.f32 0.0, %v247
  %v249 = vpop.f32.mrb[0].mxu0
  %v250 = vpop.f32.mrb[0].mxu0
  %v251 = vadd.f32 0.0, %v250
  %v252 = vpop.f32.mrb[0].mxu0
  %253 = vmatprep.mubr.bf16.mxu0 0
  %254 = vmatmul.mubr.bf16.gmra.mrb[0].mxu0 %v122
  %v255 = vpop.f32.mrb[0].mxu0
  %v256 = vadd.f32 0.0, %v255
  %v257 = vpop.f32.mrb[0].mxu0
  %v258 = vpop.f32.mrb[0].mxu0
  %v259 = vadd.f32 0.0, %v258
  %v260 = vpop.f32.mrb[0].mxu0
  %261 = vmatprep.mubr.bf16.mxu0 0
  %262 = vmatmul.mubr.bf16.gmra.mrb[0].mxu0 %v123
  %v263 = vpop.f32.mrb[0].mxu0
  %v264 = vadd.f32 0.0, %v263
  %v265 = vpop.f32.mrb[0].mxu0
  %v266 = vpop.f32.mrb[0].mxu0
  %v267 = vadd.f32 0.0, %v266
  %v268 = vpop.f32.mrb[0].mxu0
  %269 = vmatprep.mubr.bf16.mxu0 0
  %270 = vmatmul.mubr.bf16.gmra.mrb[0].mxu0 %v124
  %v271 = vpop.f32.mrb[0].mxu0
  %v272 = vadd.f32 0.0, %v271
  %v273 = vpop.f32.mrb[0].mxu0
  %v274 = vpop.f32.mrb[0].mxu0
  %v275 = vadd.f32 0.0, %v274
  %v276 = vpop.f32.mrb[0].mxu0
  %277 = vdwg.mxu0
  %v278 = vadd.f32 %v37, %v216
  %v279 = vadd.f32 %v38, %v219
  %v280 = vadd.f32 %v39, %v224
  %v281 = vadd.f32 %v40, %v227
  %v282 = vadd.f32 %v41, %v232
  %v283 = vadd.f32 %v42, %v235
  %v284 = vadd.f32 %v43, %v240
  %v285 = vadd.f32 %v44, %v243
  %v286 = vadd.f32 %v45, %v248
  %v287 = vadd.f32 %v46, %v251
  %v288 = vadd.f32 %v47, %v256
  %v289 = vadd.f32 %v48, %v259
  %v290 = vadd.f32 %v49, %v264
  %v291 = vadd.f32 %v50, %v267
  %v292 = vadd.f32 %v51, %v272
  %v293 = vadd.f32 %v52, %v275
  %294 = vst [vmem:[#allocation2] sm:$0xff] %v278
  %295 = vst [vmem:[#allocation2 + $0x8] sm:$0xff] %v279
  %296 = vst [vmem:[#allocation2 + $0x10] sm:$0xff] %v280
  %297 = vst [vmem:[#allocation2 + $0x18] sm:$0xff] %v281
  %298 = vst [vmem:[#allocation2 + $0x20] sm:$0xff] %v282
  %299 = vst [vmem:[#allocation2 + $0x28] sm:$0xff] %v283
  %300 = vst [vmem:[#allocation2 + $0x30] sm:$0xff] %v284
  %301 = vst [vmem:[#allocation2 + $0x38] sm:$0xff] %v285
  %302 = vst [vmem:[#allocation2 + $0x40] sm:$0xff] %v286
  %303 = vst [vmem:[#allocation2 + $0x48] sm:$0xff] %v287
  %304 = vst [vmem:[#allocation2 + $0x50] sm:$0xff] %v288
  %305 = vst [vmem:[#allocation2 + $0x58] sm:$0xff] %v289
  %306 = vst [vmem:[#allocation2 + $0x60] sm:$0xff] %v290
  %307 = vst [vmem:[#allocation2 + $0x68] sm:$0xff] %v291
  %308 = vst [vmem:[#allocation2 + $0x70] sm:$0xff] %v292
  %309 = vst [vmem:[#allocation2 + $0x78] sm:$0xff] %v293
  // Predicated region
  $region18: #{recsys_gnn_forward.4} parent=0 // pred_check
    %p310 = pneg %p17
  $region19: #{recsys_gnn_forward.4} parent=0 // pred_check_branch
    %312 = sbr.rel (%p310) target = $region21
  $region20: #{recsys_gnn_forward.4} parent=0 // pred_region
    %v313 = vld [vmem:[#allocation2] sm:$0xff]
    %v314 = vld [vmem:[#allocation2 + $0x8] sm:$0xff]
    %v315 = vld [vmem:[#allocation2 + $0x10] sm:$0xff]
    %v316 = vld [vmem:[#allocation2 + $0x18] sm:$0xff]
    %v317 = vld [vmem:[#allocation2 + $0x20] sm:$0xff]
    %v318 = vld [vmem:[#allocation2 + $0x28] sm:$0xff]
    %v319 = vld [vmem:[#allocation2 + $0x30] sm:$0xff]
    %v320 = vld [vmem:[#allocation2 + $0x38] sm:$0xff]
    %v321 = vld [vmem:[#allocation2 + $0x40] sm:$0xff]
    %v322 = vld [vmem:[#allocation2 + $0x48] sm:$0xff]
    %v323 = vld [vmem:[#allocation2 + $0x50] sm:$0xff]
    %v324 = vld [vmem:[#allocation2 + $0x58] sm:$0xff]
    %v325 = vld [vmem:[#allocation2 + $0x60] sm:$0xff]
    %v326 = vld [vmem:[#allocation2 + $0x68] sm:$0xff]
    %v327 = vld [vmem:[#allocation2 + $0x70] sm:$0xff]
    %v328 = vld [vmem:[#allocation2 + $0x78] sm:$0xff]
    %v329 = vpack.c.bf16 %v314, %v313
    %v330 = vpack.c.bf16 %v316, %v315
    %v331 = vpack.c.bf16 %v318, %v317
    %v332 = vpack.c.bf16 %v320, %v319
    %v333 = vpack.c.bf16 %v322, %v321
    %v334 = vpack.c.bf16 %v324, %v323
    %v335 = vpack.c.bf16 %v326, %v325
    %v336 = vpack.c.bf16 %v328, %v327
    %v345 = vunpack.c.l.b16 %v329
    %v346 = vunpack.c.h.b16 %v329
    %v347 = vunpack.c.l.b16 %v330
    %v348 = vunpack.c.h.b16 %v330
    %v349 = vunpack.c.l.b16 %v331
    %v350 = vunpack.c.h.b16 %v331
    %v351 = vunpack.c.l.b16 %v332
    %v352 = vunpack.c.h.b16 %v332
    %v353 = vunpack.c.l.b16 %v333
    %v354 = vunpack.c.h.b16 %v333
    %v355 = vunpack.c.l.b16 %v334
    %v356 = vunpack.c.h.b16 %v334
    %v357 = vunpack.c.l.b16 %v335
    %v358 = vunpack.c.h.b16 %v335
    %v359 = vunpack.c.l.b16 %v336
    %v360 = vunpack.c.h.b16 %v336
    %v361 = vpack.c.b16 %v345, %v345
    %v362 = vpack.c.b16 %v346, %v346
    %v363 = vpack.c.b16 %v347, %v347
    %v364 = vpack.c.b16 %v348, %v348
    %v365 = vpack.c.b16 %v349, %v349
    %v366 = vpack.c.b16 %v350, %v350
    %v367 = vpack.c.b16 %v351, %v351
    %v368 = vpack.c.b16 %v352, %v352
    %v369 = vpack.c.b16 %v353, %v353
    %v370 = vpack.c.b16 %v354, %v354
    %v371 = vpack.c.b16 %v355, %v355
    %v372 = vpack.c.b16 %v356, %v356
    %v373 = vpack.c.b16 %v357, %v357
    %v374 = vpack.c.b16 %v358, %v358
    %v375 = vpack.c.b16 %v359, %v359
    %v376 = vpack.c.b16 %v360, %v360
    %393 = vst [vmem:[%s3] sm:$0xf] %v361
    %394 = vst [vmem:[%s3 + $0x4] sm:$0xf] %v362
    %395 = vst [vmem:[%s3 + $0x8] sm:$0xf] %v363
    %396 = vst [vmem:[%s3 + $0xc] sm:$0xf] %v364
    %397 = vst [vmem:[%s3 + $0x10] sm:$0xf] %v365
    %398 = vst [vmem:[%s3 + $0x14] sm:$0xf] %v366
    %399 = vst [vmem:[%s3 + $0x18] sm:$0xf] %v367
    %400 = vst [vmem:[%s3 + $0x1c] sm:$0xf] %v368
    %401 = vst [vmem:[%s3 + $0x20] sm:$0xf] %v369
    %402 = vst [vmem:[%s3 + $0x24] sm:$0xf] %v370
    %403 = vst [vmem:[%s3 + $0x28] sm:$0xf] %v371
    %404 = vst [vmem:[%s3 + $0x2c] sm:$0xf] %v372
    %405 = vst [vmem:[%s3 + $0x30] sm:$0xf] %v373
    %406 = vst [vmem:[%s3 + $0x34] sm:$0xf] %v374
    %407 = vst [vmem:[%s3 + $0x38] sm:$0xf] %v375
    %408 = vst [vmem:[%s3 + $0x3c] sm:$0xf] %v376
    %v409 = vld [vmem:[%s2] sm:$0xff]
    %v410 = vld [vmem:[%s2 + $0x8] sm:$0xff]
    %v411 = vld [vmem:[%s2 + $0x10] sm:$0xff]
    %v412 = vld [vmem:[%s2 + $0x18] sm:$0xff]
    %v413 = vld [vmem:[%s2 + $0x20] sm:$0xff]
    %v414 = vld [vmem:[%s2 + $0x28] sm:$0xff]
    %v415 = vld [vmem:[%s2 + $0x30] sm:$0xff]
    %v416 = vld [vmem:[%s2 + $0x38] sm:$0xff]
    %v417 = vld [vmem:[%s2 + $0x40] sm:$0xff]
    %v418 = vld [vmem:[%s2 + $0x48] sm:$0xff]
    %v419 = vld [vmem:[%s2 + $0x50] sm:$0xff]
    %v420 = vld [vmem:[%s2 + $0x58] sm:$0xff]
    %v421 = vld [vmem:[%s2 + $0x60] sm:$0xff]
    %v422 = vld [vmem:[%s2 + $0x68] sm:$0xff]
    %v423 = vld [vmem:[%s2 + $0x70] sm:$0xff]
    %v424 = vld [vmem:[%s2 + $0x78] sm:$0xff]
    %v425 = vadd.f32 %v409, %v313
    %v426 = vadd.f32 %v410, %v314
    %v427 = vadd.f32 %v411, %v315
    %v428 = vadd.f32 %v412, %v316
    %v429 = vadd.f32 %v413, %v317
    %v430 = vadd.f32 %v414, %v318
    %v431 = vadd.f32 %v415, %v319
    %v432 = vadd.f32 %v416, %v320
    %v433 = vadd.f32 %v417, %v321
    %v434 = vadd.f32 %v418, %v322
    %v435 = vadd.f32 %v419, %v323
    %v436 = vadd.f32 %v420, %v324
    %v437 = vadd.f32 %v421, %v325
    %v438 = vadd.f32 %v422, %v326
    %v439 = vadd.f32 %v423, %v327
    %v440 = vadd.f32 %v424, %v328
    %441 = vst [vmem:[%s4] sm:$0xff] %v425
    %442 = vst [vmem:[%s4 + $0x8] sm:$0xff] %v426
    %443 = vst [vmem:[%s4 + $0x10] sm:$0xff] %v427
    %444 = vst [vmem:[%s4 + $0x18] sm:$0xff] %v428
    %445 = vst [vmem:[%s4 + $0x20] sm:$0xff] %v429
    %446 = vst [vmem:[%s4 + $0x28] sm:$0xff] %v430
    %447 = vst [vmem:[%s4 + $0x30] sm:$0xff] %v431
    %448 = vst [vmem:[%s4 + $0x38] sm:$0xff] %v432
    %449 = vst [vmem:[%s4 + $0x40] sm:$0xff] %v433
    %450 = vst [vmem:[%s4 + $0x48] sm:$0xff] %v434
    %451 = vst [vmem:[%s4 + $0x50] sm:$0xff] %v435
    %452 = vst [vmem:[%s4 + $0x58] sm:$0xff] %v436
    %453 = vst [vmem:[%s4 + $0x60] sm:$0xff] %v437
    %454 = vst [vmem:[%s4 + $0x68] sm:$0xff] %v438
    %455 = vst [vmem:[%s4 + $0x70] sm:$0xff] %v439
    %456 = vst [vmem:[%s4 + $0x78] sm:$0xff] %v440
  $region21: #{recsys_gnn_forward.4} parent=0 // pred_fallthru
    _
  // Predicated region
  $region22: #{recsys_gnn_forward.4} parent=0 // pred_check
    _
  $region23: #{recsys_gnn_forward.4} parent=0 // pred_check_branch
    %458 = sbr.rel (0) target = $region25
  $region24: #{recsys_gnn_forward.4} parent=0 // pred_region
    _
  $region25: #{recsys_gnn_forward.4} parent=0 // pred_fallthru
    _
  // Predicated region
  $region26: #{recsys_gnn_forward.4} parent=0 // pred_check
    _
  $region27: #{recsys_gnn_forward.4} parent=0 // pred_check_branch
    %460 = sbr.rel (0) target = $region29
  $region28: #{recsys_gnn_forward.4} parent=0 // pred_region
    _
  $region29: #{recsys_gnn_forward.4} parent=0 // pred_fallthru
    _
  // Predicated region
  $region30: #{recsys_gnn_forward.4} parent=0 // pred_check
    _
  $region31: #{recsys_gnn_forward.4} parent=0 // pred_check_branch
    %462 = sbr.rel (0) target = $region33
  $region32: #{recsys_gnn_forward.4} parent=0 // pred_region
    _
  $region33: #{recsys_gnn_forward.4} parent=0 // pred_fallthru
    _
  // Predicated region
  $region34: #{recsys_gnn_forward.4} parent=0 // pred_check
    _
  $region35: #{recsys_gnn_forward.4} parent=0 // pred_check_branch
    %464 = sbr.rel (0) target = $region37
  $region36: #{recsys_gnn_forward.4} parent=0 // pred_region
    _
  $region37: #{recsys_gnn_forward.4} parent=0 // pred_fallthru
    _

// kernel: recsys_gnn_forward.5
$region0: #{recsys_gnn_forward.5}
  #allocation0 [shape = 'u32[]', space=smem, size = 0x4, offset = 0x4, fixed_abs, tag = 'smem constant byte address 0x4 - core index']
  #allocation1 [shape = 'u32[144,128]{1,0:T(1,128)}', space=vmem, size = 0x12000, scoped, tag = 'internal scratch']
  #allocation2 [shape = 'f32[128,128]{1,0:T(8,128)}', space=vmem, size = 0x10000, scoped, tag = 'scratch operand']
  %s0 = inlined_call_operand.vmem [shape: bf16[128,128], index: 0, kind: input, shape index: {}]
  %s1 = inlined_call_operand.vmem [shape: bf16[128,128], index: 1, kind: input, shape index: {}]
  %s2 = inlined_call_operand.vmem [shape: f32[128,128], index: 2, kind: input, shape index: {}, may-alias: {2,4}]
  %s3 = inlined_call_operand.hbm [shape: bf16[128,128], index: 3, kind: output, shape index: {0}]
  %s4 = inlined_call_operand.vmem [shape: f32[128,128], index: 4, kind: output, shape index: {1}, may-alias: {2,4}]
  %5 = xla_tuple %s3, %s4
  %s6 = sld [smem:[#allocation0]]
  $region38: #{recsys_gnn_forward.5} parent=0
    _
  %s8 = ssub.s32 1, %s6
  %s9 = scalar_select 0, %s8, %s6
  $region1: #{recsys_gnn_forward.5} parent=0
    #allocation3 [shape = 'u8[32768]{0}', space=vmem, size = 0x8000, scoped, tag = 'output window, operand 0, single buffered']
    #allocation4 [shape = 's32[1]{0}', space=sflag, size = 0x4, scoped, tag = 'scoped memory for recsys_gnn_forward.5']
    %10 = vsyncpa [#allocation4], 0
    // Predicated region
    $region2: #{recsys_gnn_forward.5} parent=1 // pred_check
      _
    $region3: #{recsys_gnn_forward.5} parent=1 // pred_check_branch
      %12 = sbr.rel (0) target = $region5
    $region4: #{recsys_gnn_forward.5} parent=1 // pred_region
      _
    $region5: #{recsys_gnn_forward.5} parent=1 // pred_fallthru
      _
    // Predicated region
    $region6: #{recsys_gnn_forward.5} parent=1 // pred_check
      _
    $region7: #{recsys_gnn_forward.5} parent=1 // pred_check_branch
      %14 = sbr.rel (0) target = $region9
    $region8: #{recsys_gnn_forward.5} parent=1 // pred_region
      _
    $region9: #{recsys_gnn_forward.5} parent=1 // pred_fallthru
      _
    // Predicated region
    $region10: #{recsys_gnn_forward.5} parent=1 // pred_check
      _
    $region11: #{recsys_gnn_forward.5} parent=1 // pred_check_branch
      %16 = sbr.rel (0) target = $region13
    $region12: #{recsys_gnn_forward.5} parent=1 // pred_region
      _
    $region13: #{recsys_gnn_forward.5} parent=1 // pred_fallthru
      _
    %p18 = scmp.eq.s32.totalorder 0, 0
    // Predicated region
    $region14: #{recsys_gnn_forward.5} parent=1 // pred_check
      %p19 = pneg %p18
    $region15: #{recsys_gnn_forward.5} parent=1 // pred_check_branch
      %21 = sbr.rel (%p19) target = $region17
    $region16: #{recsys_gnn_forward.5} parent=1 // pred_region
      %22 = vst [vmem:[#allocation2] sm:$0xff] 0.0
      %23 = vst [vmem:[#allocation2 + $0x8] sm:$0xff] 0.0
      %24 = vst [vmem:[#allocation2 + $0x10] sm:$0xff] 0.0
      %25 = vst [vmem:[#allocation2 + $0x18] sm:$0xff] 0.0
      %26 = vst [vmem:[#allocation2 + $0x20] sm:$0xff] 0.0
      %27 = vst [vmem:[#allocation2 + $0x28] sm:$0xff] 0.0
      %28 = vst [vmem:[#allocation2 + $0x30] sm:$0xff] 0.0
      %29 = vst [vmem:[#allocation2 + $0x38] sm:$0xff] 0.0
      %30 = vst [vmem:[#allocation2 + $0x40] sm:$0xff] 0.0
      %31 = vst [vmem:[#allocation2 + $0x48] sm:$0xff] 0.0
      %32 = vst [vmem:[#allocation2 + $0x50] sm:$0xff] 0.0
      %33 = vst [vmem:[#allocation2 + $0x58] sm:$0xff] 0.0
      %34 = vst [vmem:[#allocation2 + $0x60] sm:$0xff] 0.0
      %35 = vst [vmem:[#allocation2 + $0x68] sm:$0xff] 0.0
      %36 = vst [vmem:[#allocation2 + $0x70] sm:$0xff] 0.0
      %37 = vst [vmem:[#allocation2 + $0x78] sm:$0xff] 0.0
    $region17: #{recsys_gnn_forward.5} parent=1 // pred_fallthru
      _
    %v38 = vld [vmem:[#allocation2] sm:$0xff]
    %v39 = vld [vmem:[#allocation2 + $0x8] sm:$0xff]
    %v40 = vld [vmem:[#allocation2 + $0x10] sm:$0xff]
    %v41 = vld [vmem:[#allocation2 + $0x18] sm:$0xff]
    %v42 = vld [vmem:[#allocation2 + $0x20] sm:$0xff]
    %v43 = vld [vmem:[#allocation2 + $0x28] sm:$0xff]
    %v44 = vld [vmem:[#allocation2 + $0x30] sm:$0xff]
    %v45 = vld [vmem:[#allocation2 + $0x38] sm:$0xff]
    %v46 = vld [vmem:[#allocation2 + $0x40] sm:$0xff]
    %v47 = vld [vmem:[#allocation2 + $0x48] sm:$0xff]
    %v48 = vld [vmem:[#allocation2 + $0x50] sm:$0xff]
    %v49 = vld [vmem:[#allocation2 + $0x58] sm:$0xff]
    %v50 = vld [vmem:[#allocation2 + $0x60] sm:$0xff]
    %v51 = vld [vmem:[#allocation2 + $0x68] sm:$0xff]
    %v52 = vld [vmem:[#allocation2 + $0x70] sm:$0xff]
    %v53 = vld [vmem:[#allocation2 + $0x78] sm:$0xff]
    %v54 = vld [vmem:[%s0] sm:$0xf]
    %v55 = vld [vmem:[%s0 + $0x4] sm:$0xf]
    %v56 = vld [vmem:[%s0 + $0x8] sm:$0xf]
    %v57 = vld [vmem:[%s0 + $0xc] sm:$0xf]
    %v58 = vld [vmem:[%s0 + $0x10] sm:$0xf]
    %v59 = vld [vmem:[%s0 + $0x14] sm:$0xf]
    %v60 = vld [vmem:[%s0 + $0x18] sm:$0xf]
    %v61 = vld [vmem:[%s0 + $0x1c] sm:$0xf]
    %v62 = vld [vmem:[%s0 + $0x20] sm:$0xf]
    %v63 = vld [vmem:[%s0 + $0x24] sm:$0xf]
    %v64 = vld [vmem:[%s0 + $0x28] sm:$0xf]
    %v65 = vld [vmem:[%s0 + $0x2c] sm:$0xf]
    %v66 = vld [vmem:[%s0 + $0x30] sm:$0xf]
    %v67 = vld [vmem:[%s0 + $0x34] sm:$0xf]
    %v68 = vld [vmem:[%s0 + $0x38] sm:$0xf]
    %v69 = vld [vmem:[%s0 + $0x3c] sm:$0xf]
    %v70 = vld [vmem:[%s1] sm:$0xf]
    %v71 = vld [vmem:[%s1 + $0x4] sm:$0xf]
    %v72 = vld [vmem:[%s1 + $0x8] sm:$0xf]
    %v73 = vld [vmem:[%s1 + $0xc] sm:$0xf]
    %v74 = vld [vmem:[%s1 + $0x10] sm:$0xf]
    %v75 = vld [vmem:[%s1 + $0x14] sm:$0xf]
    %v76 = vld [vmem:[%s1 + $0x18] sm:$0xf]
    %v77 = vld [vmem:[%s1 + $0x1c] sm:$0xf]
    %v78 = vld [vmem:[%s1 + $0x20] sm:$0xf]
    %v79 = vld [vmem:[%s1 + $0x24] sm:$0xf]
    %v80 = vld [vmem:[%s1 + $0x28] sm:$0xf]
    %v81 = vld [vmem:[%s1 + $0x2c] sm:$0xf]
    %v82 = vld [vmem:[%s1 + $0x30] sm:$0xf]
    %v83 = vld [vmem:[%s1 + $0x34] sm:$0xf]
    %v84 = vld [vmem:[%s1 + $0x38] sm:$0xf]
    %v85 = vld [vmem:[%s1 + $0x3c] sm:$0xf]
    %v102 = vunpack.c.l.b16 %v54
    %v103 = vunpack.c.l.b16 %v55
    %v104 = vunpack.c.l.b16 %v56
    %v105 = vunpack.c.l.b16 %v57
    %v106 = vunpack.c.l.b16 %v58
    %v107 = vunpack.c.l.b16 %v59
    %v108 = vunpack.c.l.b16 %v60
    %v109 = vunpack.c.l.b16 %v61
    %v110 = vunpack.c.l.b16 %v62
    %v111 = vunpack.c.l.b16 %v63
    %v112 = vunpack.c.l.b16 %v64
    %v113 = vunpack.c.l.b16 %v65
    %v114 = vunpack.c.l.b16 %v66
    %v115 = vunpack.c.l.b16 %v67
    %v116 = vunpack.c.l.b16 %v68
    %v117 = vunpack.c.l.b16 %v69
    %v118 = vpack.c.b16 %v103, %v102
    %v119 = vpack.c.b16 %v105, %v104
    %v120 = vpack.c.b16 %v107, %v106
    %v121 = vpack.c.b16 %v109, %v108
    %v122 = vpack.c.b16 %v111, %v110
    %v123 = vpack.c.b16 %v113, %v112
    %v124 = vpack.c.b16 %v115, %v114
    %v125 = vpack.c.b16 %v117, %v116
    %v150 = vunpack.c.l.b16 %v70
    %v151 = vunpack.c.l.b16 %v71
    %v152 = vunpack.c.l.b16 %v72
    %v153 = vunpack.c.l.b16 %v73
    %v154 = vunpack.c.l.b16 %v74
    %v155 = vunpack.c.l.b16 %v75
    %v156 = vunpack.c.l.b16 %v76
    %v157 = vunpack.c.l.b16 %v77
    %v158 = vunpack.c.l.b16 %v78
    %v159 = vunpack.c.l.b16 %v79
    %v160 = vunpack.c.l.b16 %v80
    %v161 = vunpack.c.l.b16 %v81
    %v162 = vunpack.c.l.b16 %v82
    %v163 = vunpack.c.l.b16 %v83
    %v164 = vunpack.c.l.b16 %v84
    %v165 = vunpack.c.l.b16 %v85
    %v166 = vpack.c.b16 %v151, %v150
    %v167 = vpack.c.b16 %v153, %v152
    %v168 = vpack.c.b16 %v155, %v154
    %v169 = vpack.c.b16 %v157, %v156
    %v170 = vpack.c.b16 %v159, %v158
    %v171 = vpack.c.b16 %v161, %v160
    %v172 = vpack.c.b16 %v163, %v162
    %v173 = vpack.c.b16 %v165, %v164
    %182 = vmatprep.subr.bf16.mxu0 0
    %183 = vmatpush1.bf16.msra.mxu0 %v166
    %184 = vmatprep.subr.bf16.mxu0 0
    %185 = vmatpush1.bf16.msra.mxu0 %v167
    %186 = vmatprep.subr.bf16.mxu0 0
    %187 = vmatpush1.bf16.msra.mxu0 %v168
    %188 = vmatprep.subr.bf16.mxu0 0
    %189 = vmatpush1.bf16.msra.mxu0 %v169
    %190 = vmatprep.subr.bf16.mxu0 0
    %191 = vmatpush1.bf16.msra.mxu0 %v170
    %192 = vmatprep.subr.bf16.mxu0 0
    %193 = vmatpush1.bf16.msra.mxu0 %v171
    %194 = vmatprep.subr.bf16.mxu0 0
    %195 = vmatpush1.bf16.msra.mxu0 %v172
    %196 = vmatprep.subr.bf16.mxu0 0
    %197 = vmatpush1.bf16.msra.mxu0 %v173
    %198 = vmatprep.subr.bf16.mxu0 0
    %199 = vmatpush1.bf16.msra.mxu0 0
    %200 = vmatprep.subr.bf16.mxu0 0
    %201 = vmatpush1.bf16.msra.mxu0 0
    %202 = vmatprep.subr.bf16.mxu0 0
    %203 = vmatpush1.bf16.msra.mxu0 0
    %204 = vmatprep.subr.bf16.mxu0 0
    %205 = vmatpush1.bf16.msra.mxu0 0
    %206 = vmatprep.subr.bf16.mxu0 0
    %207 = vmatpush1.bf16.msra.mxu0 0
    %208 = vmatprep.subr.bf16.mxu0 0
    %209 = vmatpush1.bf16.msra.mxu0 0
    %210 = vmatprep.subr.bf16.mxu0 0
    %211 = vmatpush1.bf16.msra.mxu0 0
    %212 = vmatprep.subr.bf16.mxu0 0
    %213 = vmatpush1.bf16.msra.mxu0 0
    %214 = vmatprep.mubr.bf16.mxu0 0
    %215 = vmatmul.mubr.bf16.gmra.mrb[0].mxu0 %v118
    %v216 = vpop.f32.mrb[0].mxu0
    %v217 = vadd.f32 0.0, %v216
    %v218 = vpop.f32.mrb[0].mxu0
    %v219 = vpop.f32.mrb[0].mxu0
    %v220 = vadd.f32 0.0, %v219
    %v221 = vpop.f32.mrb[0].mxu0
    %222 = vmatprep.mubr.bf16.mxu0 0
    %223 = vmatmul.mubr.bf16.gmra.mrb[0].mxu0 %v119
    %v224 = vpop.f32.mrb[0].mxu0
    %v225 = vadd.f32 0.0, %v224
    %v226 = vpop.f32.mrb[0].mxu0
    %v227 = vpop.f32.mrb[0].mxu0
    %v228 = vadd.f32 0.0, %v227
    %v229 = vpop.f32.mrb[0].mxu0
    %230 = vmatprep.mubr.bf16.mxu0 0
    %231 = vmatmul.mubr.bf16.gmra.mrb[0].mxu0 %v120
    %v232 = vpop.f32.mrb[0].mxu0
    %v233 = vadd.f32 0.0, %v232
    %v234 = vpop.f32.mrb[0].mxu0
    %v235 = vpop.f32.mrb[0].mxu0
    %v236 = vadd.f32 0.0, %v235
    %v237 = vpop.f32.mrb[0].mxu0
    %238 = vmatprep.mubr.bf16.mxu0 0
    %239 = vmatmul.mubr.bf16.gmra.mrb[0].mxu0 %v121
    %v240 = vpop.f32.mrb[0].mxu0
    %v241 = vadd.f32 0.0, %v240
    %v242 = vpop.f32.mrb[0].mxu0
    %v243 = vpop.f32.mrb[0].mxu0
    %v244 = vadd.f32 0.0, %v243
    %v245 = vpop.f32.mrb[0].mxu0
    %246 = vmatprep.mubr.bf16.mxu0 0
    %247 = vmatmul.mubr.bf16.gmra.mrb[0].mxu0 %v122
    %v248 = vpop.f32.mrb[0].mxu0
    %v249 = vadd.f32 0.0, %v248
    %v250 = vpop.f32.mrb[0].mxu0
    %v251 = vpop.f32.mrb[0].mxu0
    %v252 = vadd.f32 0.0, %v251
    %v253 = vpop.f32.mrb[0].mxu0
    %254 = vmatprep.mubr.bf16.mxu0 0
    %255 = vmatmul.mubr.bf16.gmra.mrb[0].mxu0 %v123
    %v256 = vpop.f32.mrb[0].mxu0
    %v257 = vadd.f32 0.0, %v256
    %v258 = vpop.f32.mrb[0].mxu0
    %v259 = vpop.f32.mrb[0].mxu0
    %v260 = vadd.f32 0.0, %v259
    %v261 = vpop.f32.mrb[0].mxu0
    %262 = vmatprep.mubr.bf16.mxu0 0
    %263 = vmatmul.mubr.bf16.gmra.mrb[0].mxu0 %v124
    %v264 = vpop.f32.mrb[0].mxu0
    %v265 = vadd.f32 0.0, %v264
    %v266 = vpop.f32.mrb[0].mxu0
    %v267 = vpop.f32.mrb[0].mxu0
    %v268 = vadd.f32 0.0, %v267
    %v269 = vpop.f32.mrb[0].mxu0
    %270 = vmatprep.mubr.bf16.mxu0 0
    %271 = vmatmul.mubr.bf16.gmra.mrb[0].mxu0 %v125
    %v272 = vpop.f32.mrb[0].mxu0
    %v273 = vadd.f32 0.0, %v272
    %v274 = vpop.f32.mrb[0].mxu0
    %v275 = vpop.f32.mrb[0].mxu0
    %v276 = vadd.f32 0.0, %v275
    %v277 = vpop.f32.mrb[0].mxu0
    %278 = vdwg.mxu0
    %v279 = vadd.f32 %v38, %v217
    %v280 = vadd.f32 %v39, %v220
    %v281 = vadd.f32 %v40, %v225
    %v282 = vadd.f32 %v41, %v228
    %v283 = vadd.f32 %v42, %v233
    %v284 = vadd.f32 %v43, %v236
    %v285 = vadd.f32 %v44, %v241
    %v286 = vadd.f32 %v45, %v244
    %v287 = vadd.f32 %v46, %v249
    %v288 = vadd.f32 %v47, %v252
    %v289 = vadd.f32 %v48, %v257
    %v290 = vadd.f32 %v49, %v260
    %v291 = vadd.f32 %v50, %v265
    %v292 = vadd.f32 %v51, %v268
    %v293 = vadd.f32 %v52, %v273
    %v294 = vadd.f32 %v53, %v276
    %295 = vst [vmem:[#allocation2] sm:$0xff] %v279
    %296 = vst [vmem:[#allocation2 + $0x8] sm:$0xff] %v280
    %297 = vst [vmem:[#allocation2 + $0x10] sm:$0xff] %v281
    %298 = vst [vmem:[#allocation2 + $0x18] sm:$0xff] %v282
    %299 = vst [vmem:[#allocation2 + $0x20] sm:$0xff] %v283
    %300 = vst [vmem:[#allocation2 + $0x28] sm:$0xff] %v284
    %301 = vst [vmem:[#allocation2 + $0x30] sm:$0xff] %v285
    %302 = vst [vmem:[#allocation2 + $0x38] sm:$0xff] %v286
    %303 = vst [vmem:[#allocation2 + $0x40] sm:$0xff] %v287
    %304 = vst [vmem:[#allocation2 + $0x48] sm:$0xff] %v288
    %305 = vst [vmem:[#allocation2 + $0x50] sm:$0xff] %v289
    %306 = vst [vmem:[#allocation2 + $0x58] sm:$0xff] %v290
    %307 = vst [vmem:[#allocation2 + $0x60] sm:$0xff] %v291
    %308 = vst [vmem:[#allocation2 + $0x68] sm:$0xff] %v292
    %309 = vst [vmem:[#allocation2 + $0x70] sm:$0xff] %v293
    %310 = vst [vmem:[#allocation2 + $0x78] sm:$0xff] %v294
    // Predicated region
    $region18: #{recsys_gnn_forward.5} parent=1 // pred_check
      %p311 = pneg %p18
    $region19: #{recsys_gnn_forward.5} parent=1 // pred_check_branch
      %313 = sbr.rel (%p311) target = $region21
    $region20: #{recsys_gnn_forward.5} parent=1 // pred_region
      %v314 = vld [vmem:[#allocation2] sm:$0xff]
      %v315 = vld [vmem:[#allocation2 + $0x8] sm:$0xff]
      %v316 = vld [vmem:[#allocation2 + $0x10] sm:$0xff]
      %v317 = vld [vmem:[#allocation2 + $0x18] sm:$0xff]
      %v318 = vld [vmem:[#allocation2 + $0x20] sm:$0xff]
      %v319 = vld [vmem:[#allocation2 + $0x28] sm:$0xff]
      %v320 = vld [vmem:[#allocation2 + $0x30] sm:$0xff]
      %v321 = vld [vmem:[#allocation2 + $0x38] sm:$0xff]
      %v322 = vld [vmem:[#allocation2 + $0x40] sm:$0xff]
      %v323 = vld [vmem:[#allocation2 + $0x48] sm:$0xff]
      %v324 = vld [vmem:[#allocation2 + $0x50] sm:$0xff]
      %v325 = vld [vmem:[#allocation2 + $0x58] sm:$0xff]
      %v326 = vld [vmem:[#allocation2 + $0x60] sm:$0xff]
      %v327 = vld [vmem:[#allocation2 + $0x68] sm:$0xff]
      %v328 = vld [vmem:[#allocation2 + $0x70] sm:$0xff]
      %v329 = vld [vmem:[#allocation2 + $0x78] sm:$0xff]
      %v330 = vpack.c.bf16 %v315, %v314
      %v331 = vpack.c.bf16 %v317, %v316
      %v332 = vpack.c.bf16 %v319, %v318
      %v333 = vpack.c.bf16 %v321, %v320
      %v334 = vpack.c.bf16 %v323, %v322
      %v335 = vpack.c.bf16 %v325, %v324
      %v336 = vpack.c.bf16 %v327, %v326
      %v337 = vpack.c.bf16 %v329, %v328
      %v346 = vunpack.c.l.b16 %v330
      %v347 = vunpack.c.h.b16 %v330
      %v348 = vunpack.c.l.b16 %v331
      %v349 = vunpack.c.h.b16 %v331
      %v350 = vunpack.c.l.b16 %v332
      %v351 = vunpack.c.h.b16 %v332
      %v352 = vunpack.c.l.b16 %v333
      %v353 = vunpack.c.h.b16 %v333
      %v354 = vunpack.c.l.b16 %v334
      %v355 = vunpack.c.h.b16 %v334
      %v356 = vunpack.c.l.b16 %v335
      %v357 = vunpack.c.h.b16 %v335
      %v358 = vunpack.c.l.b16 %v336
      %v359 = vunpack.c.h.b16 %v336
      %v360 = vunpack.c.l.b16 %v337
      %v361 = vunpack.c.h.b16 %v337
      %v362 = vpack.c.b16 %v346, %v346
      %v363 = vpack.c.b16 %v347, %v347
      %v364 = vpack.c.b16 %v348, %v348
      %v365 = vpack.c.b16 %v349, %v349
      %v366 = vpack.c.b16 %v350, %v350
      %v367 = vpack.c.b16 %v351, %v351
      %v368 = vpack.c.b16 %v352, %v352
      %v369 = vpack.c.b16 %v353, %v353
      %v370 = vpack.c.b16 %v354, %v354
      %v371 = vpack.c.b16 %v355, %v355
      %v372 = vpack.c.b16 %v356, %v356
      %v373 = vpack.c.b16 %v357, %v357
      %v374 = vpack.c.b16 %v358, %v358
      %v375 = vpack.c.b16 %v359, %v359
      %v376 = vpack.c.b16 %v360, %v360
      %v377 = vpack.c.b16 %v361, %v361
      %394 = vst [vmem:[#allocation3] sm:$0xf] %v362
      %395 = vst [vmem:[#allocation3 + $0x4] sm:$0xf] %v363
      %396 = vst [vmem:[#allocation3 + $0x8] sm:$0xf] %v364
      %397 = vst [vmem:[#allocation3 + $0xc] sm:$0xf] %v365
      %398 = vst [vmem:[#allocation3 + $0x10] sm:$0xf] %v366
      %399 = vst [vmem:[#allocation3 + $0x14] sm:$0xf] %v367
      %400 = vst [vmem:[#allocation3 + $0x18] sm:$0xf] %v368
      %401 = vst [vmem:[#allocation3 + $0x1c] sm:$0xf] %v369
      %402 = vst [vmem:[#allocation3 + $0x20] sm:$0xf] %v370
      %403 = vst [vmem:[#allocation3 + $0x24] sm:$0xf] %v371
      %404 = vst [vmem:[#allocation3 + $0x28] sm:$0xf] %v372
      %405 = vst [vmem:[#allocation3 + $0x2c] sm:$0xf] %v373
      %406 = vst [vmem:[#allocation3 + $0x30] sm:$0xf] %v374
      %407 = vst [vmem:[#allocation3 + $0x34] sm:$0xf] %v375
      %408 = vst [vmem:[#allocation3 + $0x38] sm:$0xf] %v376
      %409 = vst [vmem:[#allocation3 + $0x3c] sm:$0xf] %v377
      %v410 = vld [vmem:[%s2] sm:$0xff]
      %v411 = vld [vmem:[%s2 + $0x8] sm:$0xff]
      %v412 = vld [vmem:[%s2 + $0x10] sm:$0xff]
      %v413 = vld [vmem:[%s2 + $0x18] sm:$0xff]
      %v414 = vld [vmem:[%s2 + $0x20] sm:$0xff]
      %v415 = vld [vmem:[%s2 + $0x28] sm:$0xff]
      %v416 = vld [vmem:[%s2 + $0x30] sm:$0xff]
      %v417 = vld [vmem:[%s2 + $0x38] sm:$0xff]
      %v418 = vld [vmem:[%s2 + $0x40] sm:$0xff]
      %v419 = vld [vmem:[%s2 + $0x48] sm:$0xff]
      %v420 = vld [vmem:[%s2 + $0x50] sm:$0xff]
      %v421 = vld [vmem:[%s2 + $0x58] sm:$0xff]
      %v422 = vld [vmem:[%s2 + $0x60] sm:$0xff]
      %v423 = vld [vmem:[%s2 + $0x68] sm:$0xff]
      %v424 = vld [vmem:[%s2 + $0x70] sm:$0xff]
      %v425 = vld [vmem:[%s2 + $0x78] sm:$0xff]
      %v426 = vadd.f32 %v410, %v314
      %v427 = vadd.f32 %v411, %v315
      %v428 = vadd.f32 %v412, %v316
      %v429 = vadd.f32 %v413, %v317
      %v430 = vadd.f32 %v414, %v318
      %v431 = vadd.f32 %v415, %v319
      %v432 = vadd.f32 %v416, %v320
      %v433 = vadd.f32 %v417, %v321
      %v434 = vadd.f32 %v418, %v322
      %v435 = vadd.f32 %v419, %v323
      %v436 = vadd.f32 %v420, %v324
      %v437 = vadd.f32 %v421, %v325
      %v438 = vadd.f32 %v422, %v326
      %v439 = vadd.f32 %v423, %v327
      %v440 = vadd.f32 %v424, %v328
      %v441 = vadd.f32 %v425, %v329
      %v442 = vmul.f32 %v426, 0.33333334
      %v443 = vmul.f32 %v427, 0.33333334
      %v444 = vmul.f32 %v428, 0.33333334
      %v445 = vmul.f32 %v429, 0.33333334
      %v446 = vmul.f32 %v430, 0.33333334
      %v447 = vmul.f32 %v431, 0.33333334
      %v448 = vmul.f32 %v432, 0.33333334
      %v449 = vmul.f32 %v433, 0.33333334
      %v450 = vmul.f32 %v434, 0.33333334
      %v451 = vmul.f32 %v435, 0.33333334
      %v452 = vmul.f32 %v436, 0.33333334
      %v453 = vmul.f32 %v437, 0.33333334
      %v454 = vmul.f32 %v438, 0.33333334
      %v455 = vmul.f32 %v439, 0.33333334
      %v456 = vmul.f32 %v440, 0.33333334
      %v457 = vmul.f32 %v441, 0.33333334
      %458 = vst [vmem:[%s4] sm:$0xff] %v442
      %459 = vst [vmem:[%s4 + $0x8] sm:$0xff] %v443
      %460 = vst [vmem:[%s4 + $0x10] sm:$0xff] %v444
      %461 = vst [vmem:[%s4 + $0x18] sm:$0xff] %v445
      %462 = vst [vmem:[%s4 + $0x20] sm:$0xff] %v446
      %463 = vst [vmem:[%s4 + $0x28] sm:$0xff] %v447
      %464 = vst [vmem:[%s4 + $0x30] sm:$0xff] %v448
      %465 = vst [vmem:[%s4 + $0x38] sm:$0xff] %v449
      %466 = vst [vmem:[%s4 + $0x40] sm:$0xff] %v450
      %467 = vst [vmem:[%s4 + $0x48] sm:$0xff] %v451
      %468 = vst [vmem:[%s4 + $0x50] sm:$0xff] %v452
      %469 = vst [vmem:[%s4 + $0x58] sm:$0xff] %v453
      %470 = vst [vmem:[%s4 + $0x60] sm:$0xff] %v454
      %471 = vst [vmem:[%s4 + $0x68] sm:$0xff] %v455
      %472 = vst [vmem:[%s4 + $0x70] sm:$0xff] %v456
      %473 = vst [vmem:[%s4 + $0x78] sm:$0xff] %v457
    $region21: #{recsys_gnn_forward.5} parent=1 // pred_fallthru
      _
    // Predicated region
    $region22: #{recsys_gnn_forward.5} parent=1 // pred_check
      _
    $region23: #{recsys_gnn_forward.5} parent=1 // pred_check_branch
      %475 = sbr.rel (0) target = $region25
    $region24: #{recsys_gnn_forward.5} parent=1 // pred_region
      %s477 = ssub.s32 1024, 1024
      %478 = vsyncadd [#allocation4], %s477
      %s479 = sshll.u32 [#allocation3], 4
      %s480 = int_to_ptr.vmem [resolvable:$true] %s479
      %485 = dma.vmem_to_hbm [thread:$0]  %s480, 1024, %s3, [#allocation4], 64, 64, 4
    $region25: #{recsys_gnn_forward.5} parent=1 // pred_fallthru
      _
    // Predicated region
    $region26: #{recsys_gnn_forward.5} parent=1 // pred_check
      _
    $region27: #{recsys_gnn_forward.5} parent=1 // pred_check_branch
      %487 = sbr.rel (0) target = $region29
    $region28: #{recsys_gnn_forward.5} parent=1 // pred_region
      _
    $region29: #{recsys_gnn_forward.5} parent=1 // pred_fallthru
      _
    // Predicated region
    $region30: #{recsys_gnn_forward.5} parent=1 // pred_check
      _
    $region31: #{recsys_gnn_forward.5} parent=1 // pred_check_branch
      %489 = sbr.rel (0) target = $region33
    $region32: #{recsys_gnn_forward.5} parent=1 // pred_region
      %490 = dma.done [#allocation4], 1024
    $region33: #{recsys_gnn_forward.5} parent=1 // pred_fallthru
      _
    // Predicated region
    $region34: #{recsys_gnn_forward.5} parent=1 // pred_check
      _
    $region35: #{recsys_gnn_forward.5} parent=1 // pred_check_branch
      %492 = sbr.rel (0) target = $region37
    $region36: #{recsys_gnn_forward.5} parent=1 // pred_region
      _
    $region37: #{recsys_gnn_forward.5} parent=1 // pred_fallthru
      _
    %493 = vsyncpa [#allocation4], 1

</llo_original>
